<compile_context>
chip_gen: v6e
topology: v6e:2x2x1
jax: 0.10.0
libtpu: 0.0.40
codegen_flags: <defaults>
</compile_context>

<pallas_src>
import jax
import jax.numpy as jnp
from jax import lax
from jax.experimental import pallas as pl
from jax.experimental.pallas import tpu as pltpu

# ---------------- configuration (MetaNeXtBlock(dim=DIM)) --------------------
DIM = 32                       # number of channels
MLP_RATIO = 2
HIDDEN = MLP_RATIO * DIM       # ConvMlp hidden features (64)
SQ_K = 3                       # square_kernel_size
BAND_K = 11                    # band_kernel_size
BRANCH_RATIO = 0.125
GC = int(DIM * BRANCH_RATIO)   # 4 channels per conv branch
C_ID = DIM - 3 * GC            # identity-branch channels (20)
LS_INIT = 1e-6                 # layer-scale init
LN_EPS = 1e-5                  # nn.LayerNorm default eps

# sublane tiles holding the conv branches (PyTorch channel order, no permute needed)
SQ_ROW0 = 16                   # rows 16..23: identity ch 16..19 + 3x3 branch ch 20..23
BD_ROW0 = 24                   # rows 24..31: 1x11 branch ch 24..27 + 11x1 branch ch 28..31
assert SQ_ROW0 % 8 == 0 and SQ_ROW0 <= C_ID
assert C_ID + GC == SQ_ROW0 + 8 == BD_ROW0 and BD_ROW0 + 8 == DIM

# static tap tables
SQ_TAPS = tuple((dh, dw) for dh in (-1, 0, 1) for dw in (-1, 0, 1))               # 9 taps
BD_TAPS = tuple(sorted({(0, dw) for dw in range(-(BAND_K // 2), BAND_K // 2 + 1)}
                       | {(dh, 0) for dh in range(-(BAND_K // 2), BAND_K // 2 + 1)}))  # 21 taps


# ---------------- helpers ----------------------------------------------------
def _gelu(x):
    # Exact (erf) GELU.  erf via Abramowitz & Stegun 7.1.26 (|err| < 1.5e-7); the divide is
    # routed to the otherwise-idle EUP slot through pl.reciprocal(approx=True).
    # TODO(synk): replace with lax.erf once its Pallas-TPU lowering is guaranteed.
    r = x * 0.7071067811865476
    ax = jnp.abs(r)
    t = pl.reciprocal(1.0 + 0.3275911 * ax, approx=True)
    poly = ((((1.061405429 * t - 1.453152027) * t + 1.421413741) * t - 0.284496736) * t
            + 0.254829592) * t
    erf = 1.0 - poly * jnp.exp(-ax * ax)
    erf = jnp.where(r >= 0, erf, -erf)
    return 0.5 * x * (1.0 + erf)


# ---------------- fused forward ----------------------------------------------
def metanext_block(x, p):
    B, C, H, W = x.shape
    assert C == DIM
    HW = H * W

    def kernel(x_ref, tw_sq_ref, tw_bd_ref, bias_ref, w1_ref, b1_ref, w2_ref, b2_ref, o_ref):
        xb = x_ref[0]                                       # (C, HW): channels on sublanes, tokens on lanes

        ti = lax.broadcasted_iota(jnp.int32, (1, HW), 1)    # flattened token index (lanes)
        if (W & (W - 1)) == 0:
            wi = jnp.bitwise_and(ti, W - 1)                 # w coordinate (W is a power of two)
        else:
            wi = ti % W   # TODO(synk): non-power-of-two W relies on i32 remainder lowering (untested path)

        hm_cache, wm_cache = {}, {}

        def hvalid(dh):                                     # zero-padding mask along H, deduped
            if dh == 0:
                return None
            if dh not in hm_cache:
                ok = (ti < (H - dh) * W) if dh > 0 else (ti >= (-dh) * W)
                hm_cache[dh] = ok.astype(jnp.float32)
            return hm_cache[dh]

        def wvalid(dw):                                     # zero-padding mask along W, deduped
            if dw == 0:
                return None
            if dw not in wm_cache:
                ok = (wi < (W - dw)) if dw > 0 else (wi >= -dw)
                wm_cache[dw] = ok.astype(jnp.float32)
            return wm_cache[dw]

        def shifted(src, dh, dw):                           # out[:, t] = src[:, t + dh*W + dw] (wrapped; masks kill wrap)
            d = dh * W + dw
            return src if d == 0 else pltpu.roll(src, (-d) % HW, axis=1)

        tw_sq = tw_sq_ref[...]                              # (8, 9)   hoisted tap tables
        tw_bd = tw_bd_ref[...]                              # (8, 21)

        # ---- square tile (channels 16..23): 3x3 branch + 4 identity channels -------------
        x_sq = xb[SQ_ROW0:SQ_ROW0 + 8]
        acc_sq = None
        for dh in (-1, 0, 1):
            part = None
            for dw in (-1, 0, 1):
                r = shifted(x_sq, dh, dw)
                wm = wvalid(dw)
                if wm is not None:
                    r = r * wm
                i = SQ_TAPS.index((dh, dw))
                term = r * tw_sq[:, i:i + 1]                # per-sublane (per-channel) tap weight
                part = term if part is None else part + term
            hm = hvalid(dh)                                 # one hmask multiply per dh group
            if hm is not None:
                part = part * hm
            acc_sq = part if acc_sq is None else acc_sq + part

        # ---- band tile (channels 24..31): 1x11 branch (rows 0..3) + 11x1 branch (rows 4..7)
        x_bd = xb[BD_ROW0:BD_ROW0 + 8]
        acc_bd = None
        for i, (dh, dw) in enumerate(BD_TAPS):
            r = shifted(x_bd, dh, dw)
            m = hvalid(dh) if dw == 0 else wvalid(dw)       # exactly one of dh, dw nonzero (or both 0)
            if m is not None:
                r = r * m
            term = r * tw_bd[:, i:i + 1]
            acc_bd = term if acc_bd is None else acc_bd + term

        mixed_hi = jnp.concatenate([acc_sq, acc_bd], axis=0) + bias_ref[...]   # (16, HW)
        mixed = jnp.concatenate([xb[0:SQ_ROW0], mixed_hi], axis=0)             # (C, HW): rows 0..15 = identity

        # ---- LayerNorm over channels (sublane axis); affine folded into W1/b1 -------------
        mu = jnp.mean(mixed, axis=0, keepdims=True)
        xc = mixed - mu
        var = jnp.mean(xc * xc, axis=0, keepdims=True)
        xn = xc * lax.rsqrt(var + LN_EPS)

        # ---- ConvMlp (1x1 convs == channel matmuls): bf16 operands, f32 MXU accumulation ---
        h = jnp.dot(w1_ref[...], xn.astype(jnp.bfloat16),
                    preferred_element_type=jnp.float32) + b1_ref[...]          # (HIDDEN, HW)
        h = _gelu(h)
        y = jnp.dot(w2_ref[...], h.astype(jnp.bfloat16),
                    preferred_element_type=jnp.float32) + b2_ref[...]          # (C, HW), gamma folded in

        # ---- residual (shortcut is the original input block) -------------------------------
        o_ref[0] = y + xb

    full = lambda shape: pl.BlockSpec(shape, lambda b: (0,) * len(shape))

    x_r = x.reshape(B, C, HW)                               # NCHW -> (B, C, tokens): pure reshape, no transpose
    y_r = pl.pallas_call(
        kernel,
        out_shape=jax.ShapeDtypeStruct((B, C, HW), jnp.float32),
        grid_spec=pltpu.PrefetchScalarGridSpec(
            num_scalar_prefetch=0,
            grid=(B,),
            in_specs=[pl.BlockSpec((1, C, HW), lambda b: (b, 0, 0)),
                      full((8, len(SQ_TAPS))), full((8, len(BD_TAPS))), full((16, 1)),
                      full((HIDDEN, C)), full((HIDDEN, 1)),
                      full((C, HIDDEN)), full((C, 1))],
            out_specs=pl.BlockSpec((1, C, HW), lambda b: (b, 0, 0)),
        ),
        # grid=(B,) "parallel": feeds both v7x TensorCores at B=2; on 1-TC v5e/v6e it is just a
        # 2-iteration serial loop (fold the batch into a single step there if the ~0.7us matters).
        compiler_params=pltpu.CompilerParams(dimension_semantics=("parallel",)),
    )(x_r, p['tw_sq'], p['tw_bd'], p['bias_hi'], p['w1'], p['b1'], p['w2'], p['b2'])
    return y_r.reshape(B, C, H, W)


# ---------------- deterministic parameter init -------------------------------
def init_params(key, ls_init=LS_INIT):
    ks = jax.random.split(key, 10)
    w_hw_t = jax.random.normal(ks[0], (GC, SQ_K, SQ_K), jnp.float32) * 0.2   # torch (gc,1,3,3)
    b_hw = jax.random.normal(ks[1], (GC,), jnp.float32) * 0.05
    w_w_t = jax.random.normal(ks[2], (GC, BAND_K), jnp.float32) * 0.2        # torch (gc,1,1,11)
    b_w = jax.random.normal(ks[3], (GC,), jnp.float32) * 0.05
    w_h_t = jax.random.normal(ks[4], (GC, BAND_K), jnp.float32) * 0.2        # torch (gc,1,11,1)
    b_h = jax.random.normal(ks[5], (GC,), jnp.float32) * 0.05
    w1_t = jax.random.normal(ks[6], (HIDDEN, DIM), jnp.float32) * 0.05       # torch (out,in,1,1)
    b1 = jax.random.normal(ks[7], (HIDDEN,), jnp.float32) * 0.05
    w2_t = jax.random.normal(ks[8], (DIM, HIDDEN), jnp.float32) * 0.05
    b2 = jax.random.normal(ks[9], (DIM,), jnp.float32) * 0.05
    ln_w = jnp.ones((DIM,), jnp.float32)
    ln_b = jnp.zeros((DIM,), jnp.float32)
    gamma = jnp.full((DIM,), ls_init, jnp.float32)

    sq_p, bd_p = SQ_K // 2, BAND_K // 2

    # square-tile tap table: 8 sublane rows = channels 16..23, one lane per tap
    cols = []
    for dh, dw in SQ_TAPS:
        col = jnp.zeros((8,), jnp.float32)
        if dh == 0 and dw == 0:
            col = col.at[0:C_ID - SQ_ROW0].set(1.0)                          # identity channels 16..19
        col = col.at[C_ID - SQ_ROW0:].set(w_hw_t[:, dh + sq_p, dw + sq_p])   # 3x3 branch channels 20..23
        cols.append(col)
    tw_sq = jnp.stack(cols, axis=1)                                          # (8, 9)

    # band-tile tap table: 8 sublane rows = channels 24..31
    cols = []
    for dh, dw in BD_TAPS:
        col = jnp.zeros((8,), jnp.float32)
        if dh == 0:
            col = col.at[0:GC].set(w_w_t[:, dw + bd_p])                      # 1x11 branch channels 24..27
        if dw == 0:
            col = col.at[GC:2 * GC].set(w_h_t[:, dh + bd_p])                 # 11x1 branch channels 28..31
        cols.append(col)
    tw_bd = jnp.stack(cols, axis=1)                                          # (8, 21)

    bias_hi = jnp.concatenate([jnp.zeros((C_ID - SQ_ROW0,), jnp.float32),
                               b_hw, b_w, b_h]).reshape(16, 1)               # bias for rows 16..31

    # fold the LayerNorm affine into fc1 and the layer-scale gamma into fc2 (exact algebra)
    w1_f = (w1_t * ln_w[None, :]).astype(jnp.bfloat16)                       # (HIDDEN, DIM) bf16
    b1_f = (w1_t @ ln_b + b1).reshape(HIDDEN, 1)                             # (HIDDEN, 1) f32
    w2_f = (gamma[:, None] * w2_t).astype(jnp.bfloat16)                      # (DIM, HIDDEN) bf16
    b2_f = (gamma * b2).reshape(DIM, 1)                                      # (DIM, 1) f32

    kernel_params = dict(tw_sq=tw_sq, tw_bd=tw_bd, bias_hi=bias_hi,
                         w1=w1_f, b1=b1_f, w2=w2_f, b2=b2_f)
    torch_like = dict(w_hw_t=w_hw_t, b_hw=b_hw, w_w_t=w_w_t, b_w=b_w, w_h_t=w_h_t,
                      b_h=b_h, w1_t=w1_t, b1=b1, w2_t=w2_t, b2=b2,
                      ln_w=ln_w, ln_b=ln_b, gamma=gamma)
    return kernel_params, torch_like


# ---------------- pure-JAX reference (for verification) ----------------------
def reference_forward(x, tp):
    xid = x[:, :C_ID]
    xhw = x[:, C_ID:C_ID + GC]
    xw = x[:, C_ID + GC:C_ID + 2 * GC]
    xh = x[:, C_ID + 2 * GC:]

    def dwconv(inp, w, pad):
        return lax.conv_general_dilated(
            inp, w, window_strides=(1, 1), padding=pad,
            dimension_numbers=('NCHW', 'OIHW', 'NCHW'),
            feature_group_count=GC)

    yhw = dwconv(xhw, tp['w_hw_t'][:, None, :, :], [(1, 1), (1, 1)]) + tp['b_hw'][None, :, None, None]
    yw = dwconv(xw, tp['w_w_t'][:, None, None, :], [(0, 0), (5, 5)]) + tp['b_w'][None, :, None, None]
    yh = dwconv(xh, tp['w_h_t'][:, None, :, None], [(5, 5), (0, 0)]) + tp['b_h'][None, :, None, None]
    mixed = jnp.concatenate([xid, yhw, yw, yh], axis=1)

    t = mixed.transpose(0, 2, 3, 1)
    mu = t.mean(-1, keepdims=True)
    var = ((t - mu) ** 2).mean(-1, keepdims=True)
    tn_ = (t - mu) / jnp.sqrt(var + LN_EPS) * tp['ln_w'] + tp['ln_b']
    h = tn_ @ tp['w1_t'].T + tp['b1']
    h = jax.nn.gelu(h, approximate=False)
    y = h @ tp['w2_t'].T + tp['b2']
    y = y * tp['gamma']
    return y.transpose(0, 3, 1, 2) + x


# ---------------- main --------------------------------------------------------
if __name__ == "__main__":
    import numpy as np

    B, H, W = 2, 16, 16
    key = jax.random.PRNGKey(0)
    kx, kp = jax.random.split(key)
    x = jax.random.normal(kx, (B, DIM, H, W), jnp.float32)

    fwd = jax.jit(metanext_block)

    # Strong check (gamma = 1.0): actually exercises the mixer/LN/MLP branch, which the module's
    # 1e-6 layer scale would otherwise hide below the test tolerance.
    p_chk, t_chk = init_params(kp, ls_init=1.0)
    out_chk = jax.block_until_ready(fwd(x, p_chk))
    ref_chk = reference_forward(x, t_chk)
    np.testing.assert_allclose(np.asarray(out_chk), np.asarray(ref_chk), rtol=2e-2, atol=2e-2)

    # Module-faithful run (ls_init_value = 1e-6, the MetaNeXtBlock default).
    params, torch_like = init_params(kp, ls_init=LS_INIT)
    out = jax.block_until_ready(fwd(x, params))
    ref = reference_forward(x, torch_like)
    np.testing.assert_allclose(np.asarray(out), np.asarray(ref), rtol=1e-3, atol=1e-4)
    assert out.shape == x.shape and out.dtype == x.dtype

    print("KERNEL_OK")
</pallas_src>

<mosaic_0001>
module attributes {stable_mosaic.version = 11 : i64} {
  func.func @kernel(%arg0: i32, %arg1: memref<1x32x256xf32, #tpu.memory_space<vmem>>, %arg2: memref<8x9xf32, #tpu.memory_space<vmem>>, %arg3: memref<8x21xf32, #tpu.memory_space<vmem>>, %arg4: memref<16x1xf32, #tpu.memory_space<vmem>>, %arg5: memref<64x32xbf16, #tpu.memory_space<vmem>>, %arg6: memref<64x1xf32, #tpu.memory_space<vmem>>, %arg7: memref<32x64xbf16, #tpu.memory_space<vmem>>, %arg8: memref<32x1xf32, #tpu.memory_space<vmem>>, %arg9: memref<1x32x256xf32, #tpu.memory_space<vmem>>) attributes {dimension_semantics = [#tpu.dimension_semantics<parallel>], iteration_bounds = array<i64: 2>, scalar_prefetch = 0 : i64, scratch_operands = 0 : i64, tpu.core_type = #tpu.core_type<tc>, window_params = [{transform_indices = @transform_0, window_bounds = array<i64: 1, 32, 256>}, {pipeline_mode = #tpu.pipeline_mode<synchronous>, transform_indices = @transform_1, window_bounds = array<i64: 8, 9>}, {pipeline_mode = #tpu.pipeline_mode<synchronous>, transform_indices = @transform_2, window_bounds = array<i64: 8, 21>}, {pipeline_mode = #tpu.pipeline_mode<synchronous>, transform_indices = @transform_3, window_bounds = array<i64: 16, 1>}, {pipeline_mode = #tpu.pipeline_mode<synchronous>, transform_indices = @transform_4, window_bounds = array<i64: 64, 32>}, {pipeline_mode = #tpu.pipeline_mode<synchronous>, transform_indices = @transform_5, window_bounds = array<i64: 64, 1>}, {pipeline_mode = #tpu.pipeline_mode<synchronous>, transform_indices = @transform_6, window_bounds = array<i64: 32, 64>}, {pipeline_mode = #tpu.pipeline_mode<synchronous>, transform_indices = @transform_7, window_bounds = array<i64: 32, 1>}, {transform_indices = @transform_8, window_bounds = array<i64: 1, 32, 256>}]} {
    %c0 = arith.constant 0 : index
    %c0_0 = arith.constant 0 : index
    %c0_1 = arith.constant 0 : index
    %0 = vector.load %arg1[%c0, %c0_0, %c0_1] : memref<1x32x256xf32, #tpu.memory_space<vmem>>, vector<1x32x256xf32>
    %1 = vector.shape_cast %0 : vector<1x32x256xf32> to vector<32x256xf32>
    %2 = tpu.iota {dimensions = array<i32: 1>} : vector<1x256xi32>
    %c15_i32 = arith.constant 15 : i32
    %3 = vector.broadcast %c15_i32 : i32 to vector<1x256xi32>
    %4 = arith.andi %2, %3 : vector<1x256xi32>
    %c0_2 = arith.constant 0 : index
    %c0_3 = arith.constant 0 : index
    %5 = vector.load %arg2[%c0_2, %c0_3] : memref<8x9xf32, #tpu.memory_space<vmem>>, vector<8x9xf32>
    %c0_4 = arith.constant 0 : index
    %c0_5 = arith.constant 0 : index
    %6 = vector.load %arg3[%c0_4, %c0_5] : memref<8x21xf32, #tpu.memory_space<vmem>>, vector<8x21xf32>
    %7 = vector.extract_strided_slice %1 {offsets = [16, 0], sizes = [8, 256], strides = [1, 1]} : vector<32x256xf32> to vector<8x256xf32>
    %c17_i32 = arith.constant 17 : i32
    %8 = tpu.dynamic_rotate %7 by %c17_i32 dim 1 : vector<8x256xf32>, i32 -> vector<8x256xf32>
    %c1_i32 = arith.constant 1 : i32
    %9 = vector.broadcast %c1_i32 : i32 to vector<1x256xi32>
    %10 = arith.cmpi sge, %4, %9 : vector<1x256xi32>
    %11 = arith.extui %10 : vector<1x256xi1> to vector<1x256xi32>
    %12 = arith.sitofp %11 : vector<1x256xi32> to vector<1x256xf32>
    %13 = vector.broadcast %12 : vector<1x256xf32> to vector<8x256xf32>
    %14 = arith.mulf %8, %13 : vector<8x256xf32>
    %15 = vector.extract_strided_slice %5 {offsets = [0, 0], sizes = [8, 1], strides = [1, 1]} : vector<8x9xf32> to vector<8x1xf32>
    %16 = vector.broadcast %15 : vector<8x1xf32> to vector<8x256xf32>
    %17 = arith.mulf %14, %16 : vector<8x256xf32>
    %c16_i32 = arith.constant 16 : i32
    %18 = tpu.dynamic_rotate %7 by %c16_i32 dim 1 : vector<8x256xf32>, i32 -> vector<8x256xf32>
    %19 = vector.extract_strided_slice %5 {offsets = [0, 1], sizes = [8, 1], strides = [1, 1]} : vector<8x9xf32> to vector<8x1xf32>
    %20 = vector.broadcast %19 : vector<8x1xf32> to vector<8x256xf32>
    %21 = arith.mulf %18, %20 : vector<8x256xf32>
    %22 = arith.addf %17, %21 : vector<8x256xf32>
    %c15_i32_6 = arith.constant 15 : i32
    %23 = tpu.dynamic_rotate %7 by %c15_i32_6 dim 1 : vector<8x256xf32>, i32 -> vector<8x256xf32>
    %c15_i32_7 = arith.constant 15 : i32
    %24 = vector.broadcast %c15_i32_7 : i32 to vector<1x256xi32>
    %25 = arith.cmpi slt, %4, %24 : vector<1x256xi32>
    %26 = arith.extui %25 : vector<1x256xi1> to vector<1x256xi32>
    %27 = arith.sitofp %26 : vector<1x256xi32> to vector<1x256xf32>
    %28 = vector.broadcast %27 : vector<1x256xf32> to vector<8x256xf32>
    %29 = arith.mulf %23, %28 : vector<8x256xf32>
    %30 = vector.extract_strided_slice %5 {offsets = [0, 2], sizes = [8, 1], strides = [1, 1]} : vector<8x9xf32> to vector<8x1xf32>
    %31 = vector.broadcast %30 : vector<8x1xf32> to vector<8x256xf32>
    %32 = arith.mulf %29, %31 : vector<8x256xf32>
    %33 = arith.addf %22, %32 : vector<8x256xf32>
    %c16_i32_8 = arith.constant 16 : i32
    %34 = vector.broadcast %c16_i32_8 : i32 to vector<1x256xi32>
    %35 = arith.cmpi sge, %2, %34 : vector<1x256xi32>
    %36 = arith.extui %35 : vector<1x256xi1> to vector<1x256xi32>
    %37 = arith.sitofp %36 : vector<1x256xi32> to vector<1x256xf32>
    %38 = vector.broadcast %37 : vector<1x256xf32> to vector<8x256xf32>
    %39 = arith.mulf %33, %38 : vector<8x256xf32>
    %c1_i32_9 = arith.constant 1 : i32
    %40 = tpu.dynamic_rotate %7 by %c1_i32_9 dim 1 : vector<8x256xf32>, i32 -> vector<8x256xf32>
    %41 = vector.broadcast %12 : vector<1x256xf32> to vector<8x256xf32>
    %42 = arith.mulf %40, %41 : vector<8x256xf32>
    %43 = vector.extract_strided_slice %5 {offsets = [0, 3], sizes = [8, 1], strides = [1, 1]} : vector<8x9xf32> to vector<8x1xf32>
    %44 = vector.broadcast %43 : vector<8x1xf32> to vector<8x256xf32>
    %45 = arith.mulf %42, %44 : vector<8x256xf32>
    %46 = vector.extract_strided_slice %5 {offsets = [0, 4], sizes = [8, 1], strides = [1, 1]} : vector<8x9xf32> to vector<8x1xf32>
    %47 = vector.broadcast %46 : vector<8x1xf32> to vector<8x256xf32>
    %48 = arith.mulf %7, %47 : vector<8x256xf32>
    %49 = arith.addf %45, %48 : vector<8x256xf32>
    %c255_i32 = arith.constant 255 : i32
    %50 = tpu.dynamic_rotate %7 by %c255_i32 dim 1 : vector<8x256xf32>, i32 -> vector<8x256xf32>
    %51 = vector.broadcast %27 : vector<1x256xf32> to vector<8x256xf32>
    %52 = arith.mulf %50, %51 : vector<8x256xf32>
    %53 = vector.extract_strided_slice %5 {offsets = [0, 5], sizes = [8, 1], strides = [1, 1]} : vector<8x9xf32> to vector<8x1xf32>
    %54 = vector.broadcast %53 : vector<8x1xf32> to vector<8x256xf32>
    %55 = arith.mulf %52, %54 : vector<8x256xf32>
    %56 = arith.addf %49, %55 : vector<8x256xf32>
    %57 = arith.addf %39, %56 : vector<8x256xf32>
    %c241_i32 = arith.constant 241 : i32
    %58 = tpu.dynamic_rotate %7 by %c241_i32 dim 1 : vector<8x256xf32>, i32 -> vector<8x256xf32>
    %59 = vector.broadcast %12 : vector<1x256xf32> to vector<8x256xf32>
    %60 = arith.mulf %58, %59 : vector<8x256xf32>
    %61 = vector.extract_strided_slice %5 {offsets = [0, 6], sizes = [8, 1], strides = [1, 1]} : vector<8x9xf32> to vector<8x1xf32>
    %62 = vector.broadcast %61 : vector<8x1xf32> to vector<8x256xf32>
    %63 = arith.mulf %60, %62 : vector<8x256xf32>
    %c240_i32 = arith.constant 240 : i32
    %64 = tpu.dynamic_rotate %7 by %c240_i32 dim 1 : vector<8x256xf32>, i32 -> vector<8x256xf32>
    %65 = vector.extract_strided_slice %5 {offsets = [0, 7], sizes = [8, 1], strides = [1, 1]} : vector<8x9xf32> to vector<8x1xf32>
    %66 = vector.broadcast %65 : vector<8x1xf32> to vector<8x256xf32>
    %67 = arith.mulf %64, %66 : vector<8x256xf32>
    %68 = arith.addf %63, %67 : vector<8x256xf32>
    %c239_i32 = arith.constant 239 : i32
    %69 = tpu.dynamic_rotate %7 by %c239_i32 dim 1 : vector<8x256xf32>, i32 -> vector<8x256xf32>
    %70 = vector.broadcast %27 : vector<1x256xf32> to vector<8x256xf32>
    %71 = arith.mulf %69, %70 : vector<8x256xf32>
    %72 = vector.extract_strided_slice %5 {offsets = [0, 8], sizes = [8, 1], strides = [1, 1]} : vector<8x9xf32> to vector<8x1xf32>
    %73 = vector.broadcast %72 : vector<8x1xf32> to vector<8x256xf32>
    %74 = arith.mulf %71, %73 : vector<8x256xf32>
    %75 = arith.addf %68, %74 : vector<8x256xf32>
    %c240_i32_10 = arith.constant 240 : i32
    %76 = vector.broadcast %c240_i32_10 : i32 to vector<1x256xi32>
    %77 = arith.cmpi slt, %2, %76 : vector<1x256xi32>
    %78 = arith.extui %77 : vector<1x256xi1> to vector<1x256xi32>
    %79 = arith.sitofp %78 : vector<1x256xi32> to vector<1x256xf32>
    %80 = vector.broadcast %79 : vector<1x256xf32> to vector<8x256xf32>
    %81 = arith.mulf %75, %80 : vector<8x256xf32>
    %82 = arith.addf %57, %81 : vector<8x256xf32>
    %83 = vector.extract_strided_slice %1 {offsets = [24, 0], sizes = [8, 256], strides = [1, 1]} : vector<32x256xf32> to vector<8x256xf32>
    %c80_i32 = arith.constant 80 : i32
    %84 = tpu.dynamic_rotate %83 by %c80_i32 dim 1 : vector<8x256xf32>, i32 -> vector<8x256xf32>
    %c80_i32_11 = arith.constant 80 : i32
    %85 = vector.broadcast %c80_i32_11 : i32 to vector<1x256xi32>
    %86 = arith.cmpi sge, %2, %85 : vector<1x256xi32>
    %87 = arith.extui %86 : vector<1x256xi1> to vector<1x256xi32>
    %88 = arith.sitofp %87 : vector<1x256xi32> to vector<1x256xf32>
    %89 = vector.broadcast %88 : vector<1x256xf32> to vector<8x256xf32>
    %90 = arith.mulf %84, %89 : vector<8x256xf32>
    %91 = vector.extract_strided_slice %6 {offsets = [0, 0], sizes = [8, 1], strides = [1, 1]} : vector<8x21xf32> to vector<8x1xf32>
    %92 = vector.broadcast %91 : vector<8x1xf32> to vector<8x256xf32>
    %93 = arith.mulf %90, %92 : vector<8x256xf32>
    %c64_i32 = arith.constant 64 : i32
    %94 = tpu.dynamic_rotate %83 by %c64_i32 dim 1 : vector<8x256xf32>, i32 -> vector<8x256xf32>
    %c64_i32_12 = arith.constant 64 : i32
    %95 = vector.broadcast %c64_i32_12 : i32 to vector<1x256xi32>
    %96 = arith.cmpi sge, %2, %95 : vector<1x256xi32>
    %97 = arith.extui %96 : vector<1x256xi1> to vector<1x256xi32>
    %98 = arith.sitofp %97 : vector<1x256xi32> to vector<1x256xf32>
    %99 = vector.broadcast %98 : vector<1x256xf32> to vector<8x256xf32>
    %100 = arith.mulf %94, %99 : vector<8x256xf32>
    %101 = vector.extract_strided_slice %6 {offsets = [0, 1], sizes = [8, 1], strides = [1, 1]} : vector<8x21xf32> to vector<8x1xf32>
    %102 = vector.broadcast %101 : vector<8x1xf32> to vector<8x256xf32>
    %103 = arith.mulf %100, %102 : vector<8x256xf32>
    %104 = arith.addf %93, %103 : vector<8x256xf32>
    %c48_i32 = arith.constant 48 : i32
    %105 = tpu.dynamic_rotate %83 by %c48_i32 dim 1 : vector<8x256xf32>, i32 -> vector<8x256xf32>
    %c48_i32_13 = arith.constant 48 : i32
    %106 = vector.broadcast %c48_i32_13 : i32 to vector<1x256xi32>
    %107 = arith.cmpi sge, %2, %106 : vector<1x256xi32>
    %108 = arith.extui %107 : vector<1x256xi1> to vector<1x256xi32>
    %109 = arith.sitofp %108 : vector<1x256xi32> to vector<1x256xf32>
    %110 = vector.broadcast %109 : vector<1x256xf32> to vector<8x256xf32>
    %111 = arith.mulf %105, %110 : vector<8x256xf32>
    %112 = vector.extract_strided_slice %6 {offsets = [0, 2], sizes = [8, 1], strides = [1, 1]} : vector<8x21xf32> to vector<8x1xf32>
    %113 = vector.broadcast %112 : vector<8x1xf32> to vector<8x256xf32>
    %114 = arith.mulf %111, %113 : vector<8x256xf32>
    %115 = arith.addf %104, %114 : vector<8x256xf32>
    %c32_i32 = arith.constant 32 : i32
    %116 = tpu.dynamic_rotate %83 by %c32_i32 dim 1 : vector<8x256xf32>, i32 -> vector<8x256xf32>
    %c32_i32_14 = arith.constant 32 : i32
    %117 = vector.broadcast %c32_i32_14 : i32 to vector<1x256xi32>
    %118 = arith.cmpi sge, %2, %117 : vector<1x256xi32>
    %119 = arith.extui %118 : vector<1x256xi1> to vector<1x256xi32>
    %120 = arith.sitofp %119 : vector<1x256xi32> to vector<1x256xf32>
    %121 = vector.broadcast %120 : vector<1x256xf32> to vector<8x256xf32>
    %122 = arith.mulf %116, %121 : vector<8x256xf32>
    %123 = vector.extract_strided_slice %6 {offsets = [0, 3], sizes = [8, 1], strides = [1, 1]} : vector<8x21xf32> to vector<8x1xf32>
    %124 = vector.broadcast %123 : vector<8x1xf32> to vector<8x256xf32>
    %125 = arith.mulf %122, %124 : vector<8x256xf32>
    %126 = arith.addf %115, %125 : vector<8x256xf32>
    %c16_i32_15 = arith.constant 16 : i32
    %127 = tpu.dynamic_rotate %83 by %c16_i32_15 dim 1 : vector<8x256xf32>, i32 -> vector<8x256xf32>
    %128 = vector.broadcast %37 : vector<1x256xf32> to vector<8x256xf32>
    %129 = arith.mulf %127, %128 : vector<8x256xf32>
    %130 = vector.extract_strided_slice %6 {offsets = [0, 4], sizes = [8, 1], strides = [1, 1]} : vector<8x21xf32> to vector<8x1xf32>
    %131 = vector.broadcast %130 : vector<8x1xf32> to vector<8x256xf32>
    %132 = arith.mulf %129, %131 : vector<8x256xf32>
    %133 = arith.addf %126, %132 : vector<8x256xf32>
    %c5_i32 = arith.constant 5 : i32
    %134 = tpu.dynamic_rotate %83 by %c5_i32 dim 1 : vector<8x256xf32>, i32 -> vector<8x256xf32>
    %c5_i32_16 = arith.constant 5 : i32
    %135 = vector.broadcast %c5_i32_16 : i32 to vector<1x256xi32>
    %136 = arith.cmpi sge, %4, %135 : vector<1x256xi32>
    %137 = arith.extui %136 : vector<1x256xi1> to vector<1x256xi32>
    %138 = arith.sitofp %137 : vector<1x256xi32> to vector<1x256xf32>
    %139 = vector.broadcast %138 : vector<1x256xf32> to vector<8x256xf32>
    %140 = arith.mulf %134, %139 : vector<8x256xf32>
    %141 = vector.extract_strided_slice %6 {offsets = [0, 5], sizes = [8, 1], strides = [1, 1]} : vector<8x21xf32> to vector<8x1xf32>
    %142 = vector.broadcast %141 : vector<8x1xf32> to vector<8x256xf32>
    %143 = arith.mulf %140, %142 : vector<8x256xf32>
    %144 = arith.addf %133, %143 : vector<8x256xf32>
    %c4_i32 = arith.constant 4 : i32
    %145 = tpu.dynamic_rotate %83 by %c4_i32 dim 1 : vector<8x256xf32>, i32 -> vector<8x256xf32>
    %c4_i32_17 = arith.constant 4 : i32
    %146 = vector.broadcast %c4_i32_17 : i32 to vector<1x256xi32>
    %147 = arith.cmpi sge, %4, %146 : vector<1x256xi32>
    %148 = arith.extui %147 : vector<1x256xi1> to vector<1x256xi32>
    %149 = arith.sitofp %148 : vector<1x256xi32> to vector<1x256xf32>
    %150 = vector.broadcast %149 : vector<1x256xf32> to vector<8x256xf32>
    %151 = arith.mulf %145, %150 : vector<8x256xf32>
    %152 = vector.extract_strided_slice %6 {offsets = [0, 6], sizes = [8, 1], strides = [1, 1]} : vector<8x21xf32> to vector<8x1xf32>
    %153 = vector.broadcast %152 : vector<8x1xf32> to vector<8x256xf32>
    %154 = arith.mulf %151, %153 : vector<8x256xf32>
    %155 = arith.addf %144, %154 : vector<8x256xf32>
    %c3_i32 = arith.constant 3 : i32
    %156 = tpu.dynamic_rotate %83 by %c3_i32 dim 1 : vector<8x256xf32>, i32 -> vector<8x256xf32>
    %c3_i32_18 = arith.constant 3 : i32
    %157 = vector.broadcast %c3_i32_18 : i32 to vector<1x256xi32>
    %158 = arith.cmpi sge, %4, %157 : vector<1x256xi32>
    %159 = arith.extui %158 : vector<1x256xi1> to vector<1x256xi32>
    %160 = arith.sitofp %159 : vector<1x256xi32> to vector<1x256xf32>
    %161 = vector.broadcast %160 : vector<1x256xf32> to vector<8x256xf32>
    %162 = arith.mulf %156, %161 : vector<8x256xf32>
    %163 = vector.extract_strided_slice %6 {offsets = [0, 7], sizes = [8, 1], strides = [1, 1]} : vector<8x21xf32> to vector<8x1xf32>
    %164 = vector.broadcast %163 : vector<8x1xf32> to vector<8x256xf32>
    %165 = arith.mulf %162, %164 : vector<8x256xf32>
    %166 = arith.addf %155, %165 : vector<8x256xf32>
    %c2_i32 = arith.constant 2 : i32
    %167 = tpu.dynamic_rotate %83 by %c2_i32 dim 1 : vector<8x256xf32>, i32 -> vector<8x256xf32>
    %c2_i32_19 = arith.constant 2 : i32
    %168 = vector.broadcast %c2_i32_19 : i32 to vector<1x256xi32>
    %169 = arith.cmpi sge, %4, %168 : vector<1x256xi32>
    %170 = arith.extui %169 : vector<1x256xi1> to vector<1x256xi32>
    %171 = arith.sitofp %170 : vector<1x256xi32> to vector<1x256xf32>
    %172 = vector.broadcast %171 : vector<1x256xf32> to vector<8x256xf32>
    %173 = arith.mulf %167, %172 : vector<8x256xf32>
    %174 = vector.extract_strided_slice %6 {offsets = [0, 8], sizes = [8, 1], strides = [1, 1]} : vector<8x21xf32> to vector<8x1xf32>
    %175 = vector.broadcast %174 : vector<8x1xf32> to vector<8x256xf32>
    %176 = arith.mulf %173, %175 : vector<8x256xf32>
    %177 = arith.addf %166, %176 : vector<8x256xf32>
    %c1_i32_20 = arith.constant 1 : i32
    %178 = tpu.dynamic_rotate %83 by %c1_i32_20 dim 1 : vector<8x256xf32>, i32 -> vector<8x256xf32>
    %179 = vector.broadcast %12 : vector<1x256xf32> to vector<8x256xf32>
    %180 = arith.mulf %178, %179 : vector<8x256xf32>
    %181 = vector.extract_strided_slice %6 {offsets = [0, 9], sizes = [8, 1], strides = [1, 1]} : vector<8x21xf32> to vector<8x1xf32>
    %182 = vector.broadcast %181 : vector<8x1xf32> to vector<8x256xf32>
    %183 = arith.mulf %180, %182 : vector<8x256xf32>
    %184 = arith.addf %177, %183 : vector<8x256xf32>
    %185 = vector.extract_strided_slice %6 {offsets = [0, 10], sizes = [8, 1], strides = [1, 1]} : vector<8x21xf32> to vector<8x1xf32>
    %186 = vector.broadcast %185 : vector<8x1xf32> to vector<8x256xf32>
    %187 = arith.mulf %83, %186 : vector<8x256xf32>
    %188 = arith.addf %184, %187 : vector<8x256xf32>
    %c255_i32_21 = arith.constant 255 : i32
    %189 = tpu.dynamic_rotate %83 by %c255_i32_21 dim 1 : vector<8x256xf32>, i32 -> vector<8x256xf32>
    %190 = vector.broadcast %27 : vector<1x256xf32> to vector<8x256xf32>
    %191 = arith.mulf %189, %190 : vector<8x256xf32>
    %192 = vector.extract_strided_slice %6 {offsets = [0, 11], sizes = [8, 1], strides = [1, 1]} : vector<8x21xf32> to vector<8x1xf32>
    %193 = vector.broadcast %192 : vector<8x1xf32> to vector<8x256xf32>
    %194 = arith.mulf %191, %193 : vector<8x256xf32>
    %195 = arith.addf %188, %194 : vector<8x256xf32>
    %c254_i32 = arith.constant 254 : i32
    %196 = tpu.dynamic_rotate %83 by %c254_i32 dim 1 : vector<8x256xf32>, i32 -> vector<8x256xf32>
    %c14_i32 = arith.constant 14 : i32
    %197 = vector.broadcast %c14_i32 : i32 to vector<1x256xi32>
    %198 = arith.cmpi slt, %4, %197 : vector<1x256xi32>
    %199 = arith.extui %198 : vector<1x256xi1> to vector<1x256xi32>
    %200 = arith.sitofp %199 : vector<1x256xi32> to vector<1x256xf32>
    %201 = vector.broadcast %200 : vector<1x256xf32> to vector<8x256xf32>
    %202 = arith.mulf %196, %201 : vector<8x256xf32>
    %203 = vector.extract_strided_slice %6 {offsets = [0, 12], sizes = [8, 1], strides = [1, 1]} : vector<8x21xf32> to vector<8x1xf32>
    %204 = vector.broadcast %203 : vector<8x1xf32> to vector<8x256xf32>
    %205 = arith.mulf %202, %204 : vector<8x256xf32>
    %206 = arith.addf %195, %205 : vector<8x256xf32>
    %c253_i32 = arith.constant 253 : i32
    %207 = tpu.dynamic_rotate %83 by %c253_i32 dim 1 : vector<8x256xf32>, i32 -> vector<8x256xf32>
    %c13_i32 = arith.constant 13 : i32
    %208 = vector.broadcast %c13_i32 : i32 to vector<1x256xi32>
    %209 = arith.cmpi slt, %4, %208 : vector<1x256xi32>
    %210 = arith.extui %209 : vector<1x256xi1> to vector<1x256xi32>
    %211 = arith.sitofp %210 : vector<1x256xi32> to vector<1x256xf32>
    %212 = vector.broadcast %211 : vector<1x256xf32> to vector<8x256xf32>
    %213 = arith.mulf %207, %212 : vector<8x256xf32>
    %214 = vector.extract_strided_slice %6 {offsets = [0, 13], sizes = [8, 1], strides = [1, 1]} : vector<8x21xf32> to vector<8x1xf32>
    %215 = vector.broadcast %214 : vector<8x1xf32> to vector<8x256xf32>
    %216 = arith.mulf %213, %215 : vector<8x256xf32>
    %217 = arith.addf %206, %216 : vector<8x256xf32>
    %c252_i32 = arith.constant 252 : i32
    %218 = tpu.dynamic_rotate %83 by %c252_i32 dim 1 : vector<8x256xf32>, i32 -> vector<8x256xf32>
    %c12_i32 = arith.constant 12 : i32
    %219 = vector.broadcast %c12_i32 : i32 to vector<1x256xi32>
    %220 = arith.cmpi slt, %4, %219 : vector<1x256xi32>
    %221 = arith.extui %220 : vector<1x256xi1> to vector<1x256xi32>
    %222 = arith.sitofp %221 : vector<1x256xi32> to vector<1x256xf32>
    %223 = vector.broadcast %222 : vector<1x256xf32> to vector<8x256xf32>
    %224 = arith.mulf %218, %223 : vector<8x256xf32>
    %225 = vector.extract_strided_slice %6 {offsets = [0, 14], sizes = [8, 1], strides = [1, 1]} : vector<8x21xf32> to vector<8x1xf32>
    %226 = vector.broadcast %225 : vector<8x1xf32> to vector<8x256xf32>
    %227 = arith.mulf %224, %226 : vector<8x256xf32>
    %228 = arith.addf %217, %227 : vector<8x256xf32>
    %c251_i32 = arith.constant 251 : i32
    %229 = tpu.dynamic_rotate %83 by %c251_i32 dim 1 : vector<8x256xf32>, i32 -> vector<8x256xf32>
    %c11_i32 = arith.constant 11 : i32
    %230 = vector.broadcast %c11_i32 : i32 to vector<1x256xi32>
    %231 = arith.cmpi slt, %4, %230 : vector<1x256xi32>
    %232 = arith.extui %231 : vector<1x256xi1> to vector<1x256xi32>
    %233 = arith.sitofp %232 : vector<1x256xi32> to vector<1x256xf32>
    %234 = vector.broadcast %233 : vector<1x256xf32> to vector<8x256xf32>
    %235 = arith.mulf %229, %234 : vector<8x256xf32>
    %236 = vector.extract_strided_slice %6 {offsets = [0, 15], sizes = [8, 1], strides = [1, 1]} : vector<8x21xf32> to vector<8x1xf32>
    %237 = vector.broadcast %236 : vector<8x1xf32> to vector<8x256xf32>
    %238 = arith.mulf %235, %237 : vector<8x256xf32>
    %239 = arith.addf %228, %238 : vector<8x256xf32>
    %c240_i32_22 = arith.constant 240 : i32
    %240 = tpu.dynamic_rotate %83 by %c240_i32_22 dim 1 : vector<8x256xf32>, i32 -> vector<8x256xf32>
    %241 = vector.broadcast %79 : vector<1x256xf32> to vector<8x256xf32>
    %242 = arith.mulf %240, %241 : vector<8x256xf32>
    %243 = vector.extract_strided_slice %6 {offsets = [0, 16], sizes = [8, 1], strides = [1, 1]} : vector<8x21xf32> to vector<8x1xf32>
    %244 = vector.broadcast %243 : vector<8x1xf32> to vector<8x256xf32>
    %245 = arith.mulf %242, %244 : vector<8x256xf32>
    %246 = arith.addf %239, %245 : vector<8x256xf32>
    %c224_i32 = arith.constant 224 : i32
    %247 = tpu.dynamic_rotate %83 by %c224_i32 dim 1 : vector<8x256xf32>, i32 -> vector<8x256xf32>
    %c224_i32_23 = arith.constant 224 : i32
    %248 = vector.broadcast %c224_i32_23 : i32 to vector<1x256xi32>
    %249 = arith.cmpi slt, %2, %248 : vector<1x256xi32>
    %250 = arith.extui %249 : vector<1x256xi1> to vector<1x256xi32>
    %251 = arith.sitofp %250 : vector<1x256xi32> to vector<1x256xf32>
    %252 = vector.broadcast %251 : vector<1x256xf32> to vector<8x256xf32>
    %253 = arith.mulf %247, %252 : vector<8x256xf32>
    %254 = vector.extract_strided_slice %6 {offsets = [0, 17], sizes = [8, 1], strides = [1, 1]} : vector<8x21xf32> to vector<8x1xf32>
    %255 = vector.broadcast %254 : vector<8x1xf32> to vector<8x256xf32>
    %256 = arith.mulf %253, %255 : vector<8x256xf32>
    %257 = arith.addf %246, %256 : vector<8x256xf32>
    %c208_i32 = arith.constant 208 : i32
    %258 = tpu.dynamic_rotate %83 by %c208_i32 dim 1 : vector<8x256xf32>, i32 -> vector<8x256xf32>
    %c208_i32_24 = arith.constant 208 : i32
    %259 = vector.broadcast %c208_i32_24 : i32 to vector<1x256xi32>
    %260 = arith.cmpi slt, %2, %259 : vector<1x256xi32>
    %261 = arith.extui %260 : vector<1x256xi1> to vector<1x256xi32>
    %262 = arith.sitofp %261 : vector<1x256xi32> to vector<1x256xf32>
    %263 = vector.broadcast %262 : vector<1x256xf32> to vector<8x256xf32>
    %264 = arith.mulf %258, %263 : vector<8x256xf32>
    %265 = vector.extract_strided_slice %6 {offsets = [0, 18], sizes = [8, 1], strides = [1, 1]} : vector<8x21xf32> to vector<8x1xf32>
    %266 = vector.broadcast %265 : vector<8x1xf32> to vector<8x256xf32>
    %267 = arith.mulf %264, %266 : vector<8x256xf32>
    %268 = arith.addf %257, %267 : vector<8x256xf32>
    %c192_i32 = arith.constant 192 : i32
    %269 = tpu.dynamic_rotate %83 by %c192_i32 dim 1 : vector<8x256xf32>, i32 -> vector<8x256xf32>
    %c192_i32_25 = arith.constant 192 : i32
    %270 = vector.broadcast %c192_i32_25 : i32 to vector<1x256xi32>
    %271 = arith.cmpi slt, %2, %270 : vector<1x256xi32>
    %272 = arith.extui %271 : vector<1x256xi1> to vector<1x256xi32>
    %273 = arith.sitofp %272 : vector<1x256xi32> to vector<1x256xf32>
    %274 = vector.broadcast %273 : vector<1x256xf32> to vector<8x256xf32>
    %275 = arith.mulf %269, %274 : vector<8x256xf32>
    %276 = vector.extract_strided_slice %6 {offsets = [0, 19], sizes = [8, 1], strides = [1, 1]} : vector<8x21xf32> to vector<8x1xf32>
    %277 = vector.broadcast %276 : vector<8x1xf32> to vector<8x256xf32>
    %278 = arith.mulf %275, %277 : vector<8x256xf32>
    %279 = arith.addf %268, %278 : vector<8x256xf32>
    %c176_i32 = arith.constant 176 : i32
    %280 = tpu.dynamic_rotate %83 by %c176_i32 dim 1 : vector<8x256xf32>, i32 -> vector<8x256xf32>
    %c176_i32_26 = arith.constant 176 : i32
    %281 = vector.broadcast %c176_i32_26 : i32 to vector<1x256xi32>
    %282 = arith.cmpi slt, %2, %281 : vector<1x256xi32>
    %283 = arith.extui %282 : vector<1x256xi1> to vector<1x256xi32>
    %284 = arith.sitofp %283 : vector<1x256xi32> to vector<1x256xf32>
    %285 = vector.broadcast %284 : vector<1x256xf32> to vector<8x256xf32>
    %286 = arith.mulf %280, %285 : vector<8x256xf32>
    %287 = vector.extract_strided_slice %6 {offsets = [0, 20], sizes = [8, 1], strides = [1, 1]} : vector<8x21xf32> to vector<8x1xf32>
    %288 = vector.broadcast %287 : vector<8x1xf32> to vector<8x256xf32>
    %289 = arith.mulf %286, %288 : vector<8x256xf32>
    %290 = arith.addf %279, %289 : vector<8x256xf32>
    %291 = tpu.concatenate %82, %290 in 0 : vector<8x256xf32>, vector<8x256xf32> -> vector<16x256xf32>
    %c0_27 = arith.constant 0 : index
    %c0_28 = arith.constant 0 : index
    %292 = vector.load %arg4[%c0_27, %c0_28] : memref<16x1xf32, #tpu.memory_space<vmem>>, vector<16x1xf32>
    %293 = vector.broadcast %292 : vector<16x1xf32> to vector<16x256xf32>
    %294 = arith.addf %291, %293 : vector<16x256xf32>
    %295 = vector.extract_strided_slice %1 {offsets = [0, 0], sizes = [16, 256], strides = [1, 1]} : vector<32x256xf32> to vector<16x256xf32>
    %296 = tpu.concatenate %295, %294 in 0 : vector<16x256xf32>, vector<16x256xf32> -> vector<32x256xf32>
    %cst = arith.constant dense<0.000000e+00> : vector<256xf32>
    %297 = vector.multi_reduction <add>, %296, %cst [0] : vector<32x256xf32> to vector<256xf32>
    %298 = vector.shape_cast %297 : vector<256xf32> to vector<1x256xf32>
    %cst_29 = arith.constant 3.200000e+01 : f32
    %299 = vector.broadcast %cst_29 : f32 to vector<1x256xf32>
    %300 = arith.divf %298, %299 : vector<1x256xf32>
    %301 = vector.broadcast %300 : vector<1x256xf32> to vector<32x256xf32>
    %302 = arith.subf %296, %301 : vector<32x256xf32>
    %303 = arith.mulf %302, %302 : vector<32x256xf32>
    %cst_30 = arith.constant dense<0.000000e+00> : vector<256xf32>
    %304 = vector.multi_reduction <add>, %303, %cst_30 [0] : vector<32x256xf32> to vector<256xf32>
    %305 = vector.shape_cast %304 : vector<256xf32> to vector<1x256xf32>
    %cst_31 = arith.constant 3.200000e+01 : f32
    %306 = vector.broadcast %cst_31 : f32 to vector<1x256xf32>
    %307 = arith.divf %305, %306 : vector<1x256xf32>
    %cst_32 = arith.constant 9.99999974E-6 : f32
    %308 = vector.broadcast %cst_32 : f32 to vector<1x256xf32>
    %309 = arith.addf %307, %308 : vector<1x256xf32>
    %310 = math.rsqrt %309 : vector<1x256xf32>
    %311 = vector.broadcast %310 : vector<1x256xf32> to vector<32x256xf32>
    %312 = arith.mulf %302, %311 : vector<32x256xf32>
    %c0_33 = arith.constant 0 : index
    %c0_34 = arith.constant 0 : index
    %313 = vector.load %arg5[%c0_33, %c0_34] : memref<64x32xbf16, #tpu.memory_space<vmem>>, vector<64x32xbf16>
    %314 = arith.truncf %312 : vector<32x256xf32> to vector<32x256xbf16>
    %cst_35 = arith.constant dense<0.000000e+00> : vector<64x256xf32>
    %315 = tpu.matmul %313, %314, %cst_35 {dimension_numbers = #tpu.dot_dimension_numbers<[1], [0], [0], [1], [0, 0, 1, 1], [], []>} : vector<64x32xbf16>, vector<32x256xbf16>, vector<64x256xf32> -> vector<64x256xf32>
    %c0_36 = arith.constant 0 : index
    %c0_37 = arith.constant 0 : index
    %316 = vector.load %arg6[%c0_36, %c0_37] : memref<64x1xf32, #tpu.memory_space<vmem>>, vector<64x1xf32>
    %317 = vector.broadcast %316 : vector<64x1xf32> to vector<64x256xf32>
    %318 = arith.addf %315, %317 : vector<64x256xf32>
    %cst_38 = arith.constant 0.707106769 : f32
    %319 = vector.broadcast %cst_38 : f32 to vector<64x256xf32>
    %320 = arith.mulf %318, %319 : vector<64x256xf32>
    %321 = math.absf %320 : vector<64x256xf32>
    %cst_39 = arith.constant 0.327591091 : f32
    %322 = vector.broadcast %cst_39 : f32 to vector<64x256xf32>
    %323 = arith.mulf %322, %321 : vector<64x256xf32>
    %cst_40 = arith.constant 1.000000e+00 : f32
    %324 = vector.broadcast %cst_40 : f32 to vector<64x256xf32>
    %325 = arith.addf %324, %323 : vector<64x256xf32>
    %326 = tpu.reciprocal %325 {approx = true} : vector<64x256xf32> -> vector<64x256xf32>
    %cst_41 = arith.constant 1.06140542 : f32
    %327 = vector.broadcast %cst_41 : f32 to vector<64x256xf32>
    %328 = arith.mulf %327, %326 : vector<64x256xf32>
    %cst_42 = arith.constant 1.45315206 : f32
    %329 = vector.broadcast %cst_42 : f32 to vector<64x256xf32>
    %330 = arith.subf %328, %329 : vector<64x256xf32>
    %331 = arith.mulf %330, %326 : vector<64x256xf32>
    %cst_43 = arith.constant 1.42141378 : f32
    %332 = vector.broadcast %cst_43 : f32 to vector<64x256xf32>
    %333 = arith.addf %331, %332 : vector<64x256xf32>
    %334 = arith.mulf %333, %326 : vector<64x256xf32>
    %cst_44 = arith.constant 0.284496725 : f32
    %335 = vector.broadcast %cst_44 : f32 to vector<64x256xf32>
    %336 = arith.subf %334, %335 : vector<64x256xf32>
    %337 = arith.mulf %336, %326 : vector<64x256xf32>
    %cst_45 = arith.constant 0.254829586 : f32
    %338 = vector.broadcast %cst_45 : f32 to vector<64x256xf32>
    %339 = arith.addf %337, %338 : vector<64x256xf32>
    %340 = arith.mulf %339, %326 : vector<64x256xf32>
    %cst_46 = arith.constant 0.000000e+00 : f32
    %341 = vector.broadcast %cst_46 : f32 to vector<64x256xf32>
    %342 = arith.subf %341, %321 : vector<64x256xf32>
    %343 = arith.mulf %342, %321 : vector<64x256xf32>
    %344 = math.exp %343 : vector<64x256xf32>
    %345 = arith.mulf %340, %344 : vector<64x256xf32>
    %cst_47 = arith.constant 1.000000e+00 : f32
    %346 = vector.broadcast %cst_47 : f32 to vector<64x256xf32>
    %347 = arith.subf %346, %345 : vector<64x256xf32>
    %cst_48 = arith.constant 0.000000e+00 : f32
    %348 = vector.broadcast %cst_48 : f32 to vector<64x256xf32>
    %349 = arith.cmpf oge, %320, %348 : vector<64x256xf32>
    %cst_49 = arith.constant 0.000000e+00 : f32
    %350 = vector.broadcast %cst_49 : f32 to vector<64x256xf32>
    %351 = arith.subf %350, %347 : vector<64x256xf32>
    %352 = arith.select %349, %347, %351 : vector<64x256xi1>, vector<64x256xf32>
    %cst_50 = arith.constant 5.000000e-01 : f32
    %353 = vector.broadcast %cst_50 : f32 to vector<64x256xf32>
    %354 = arith.mulf %353, %318 : vector<64x256xf32>
    %cst_51 = arith.constant 1.000000e+00 : f32
    %355 = vector.broadcast %cst_51 : f32 to vector<64x256xf32>
    %356 = arith.addf %355, %352 : vector<64x256xf32>
    %357 = arith.mulf %354, %356 : vector<64x256xf32>
    %c0_52 = arith.constant 0 : index
    %c0_53 = arith.constant 0 : index
    %358 = vector.load %arg7[%c0_52, %c0_53] : memref<32x64xbf16, #tpu.memory_space<vmem>>, vector<32x64xbf16>
    %359 = arith.truncf %357 : vector<64x256xf32> to vector<64x256xbf16>
    %cst_54 = arith.constant dense<0.000000e+00> : vector<32x256xf32>
    %360 = tpu.matmul %358, %359, %cst_54 {dimension_numbers = #tpu.dot_dimension_numbers<[1], [0], [0], [1], [0, 0, 1, 1], [], []>} : vector<32x64xbf16>, vector<64x256xbf16>, vector<32x256xf32> -> vector<32x256xf32>
    %c0_55 = arith.constant 0 : index
    %c0_56 = arith.constant 0 : index
    %361 = vector.load %arg8[%c0_55, %c0_56] : memref<32x1xf32, #tpu.memory_space<vmem>>, vector<32x1xf32>
    %362 = vector.broadcast %361 : vector<32x1xf32> to vector<32x256xf32>
    %363 = arith.addf %360, %362 : vector<32x256xf32>
    %364 = arith.addf %363, %1 : vector<32x256xf32>
    %c0_57 = arith.constant 0 : index
    %c0_58 = arith.constant 0 : index
    %c0_59 = arith.constant 0 : index
    %365 = vector.load %arg9[%c0_57, %c0_58, %c0_59] : memref<1x32x256xf32, #tpu.memory_space<vmem>>, vector<1x32x256xf32>
    %366 = vector.shape_cast %365 : vector<1x32x256xf32> to vector<32x256xf32>
    %367 = vector.shape_cast %364 : vector<32x256xf32> to vector<1x32x256xf32>
    tpu.vector_store %arg9[%c0_57, %c0_58, %c0_59], %367 {strides = array<i32>} : memref<1x32x256xf32, #tpu.memory_space<vmem>>, vector<1x32x256xf32>,
    return
  }
  func.func @transform_0(%arg0: i32) -> (i32, i32, i32) {
    %c0_i32 = arith.constant 0 : i32
    %c0_i32_0 = arith.constant 0 : i32
    %c0_i32_1 = arith.constant 0 : i32
    return %arg0, %c0_i32, %c0_i32_0 : i32, i32, i32
  }
  func.func @transform_1(%arg0: i32) -> (i32, i32) {
    %c0_i32 = arith.constant 0 : i32
    %c0_i32_0 = arith.constant 0 : i32
    %c0_i32_1 = arith.constant 0 : i32
    return %c0_i32, %c0_i32_0 : i32, i32
  }
  func.func @transform_2(%arg0: i32) -> (i32, i32) {
    %c0_i32 = arith.constant 0 : i32
    %c0_i32_0 = arith.constant 0 : i32
    %c0_i32_1 = arith.constant 0 : i32
    return %c0_i32, %c0_i32_0 : i32, i32
  }
  func.func @transform_3(%arg0: i32) -> (i32, i32) {
    %c0_i32 = arith.constant 0 : i32
    %c0_i32_0 = arith.constant 0 : i32
    %c0_i32_1 = arith.constant 0 : i32
    return %c0_i32, %c0_i32_0 : i32, i32
  }
  func.func @transform_4(%arg0: i32) -> (i32, i32) {
    %c0_i32 = arith.constant 0 : i32
    %c0_i32_0 = arith.constant 0 : i32
    %c0_i32_1 = arith.constant 0 : i32
    return %c0_i32, %c0_i32_0 : i32, i32
  }
  func.func @transform_5(%arg0: i32) -> (i32, i32) {
    %c0_i32 = arith.constant 0 : i32
    %c0_i32_0 = arith.constant 0 : i32
    %c0_i32_1 = arith.constant 0 : i32
    return %c0_i32, %c0_i32_0 : i32, i32
  }
  func.func @transform_6(%arg0: i32) -> (i32, i32) {
    %c0_i32 = arith.constant 0 : i32
    %c0_i32_0 = arith.constant 0 : i32
    %c0_i32_1 = arith.constant 0 : i32
    return %c0_i32, %c0_i32_0 : i32, i32
  }
  func.func @transform_7(%arg0: i32) -> (i32, i32) {
    %c0_i32 = arith.constant 0 : i32
    %c0_i32_0 = arith.constant 0 : i32
    %c0_i32_1 = arith.constant 0 : i32
    return %c0_i32, %c0_i32_0 : i32, i32
  }
  func.func @transform_8(%arg0: i32) -> (i32, i32, i32) {
    %c0_i32 = arith.constant 0 : i32
    %c0_i32_0 = arith.constant 0 : i32
    %c0_i32_1 = arith.constant 0 : i32
    return %arg0, %c0_i32, %c0_i32_0 : i32, i32, i32
  }
}

</mosaic_0001>

<llo_original>
// kernel: metanext_block.1
$region0: #{metanext_block.1}
  #allocation0 [shape = 'u32[]', space=smem, size = 0x4, offset = 0x4, fixed_abs, tag = 'smem constant byte address 0x4 - core index']
  #allocation1 [shape = 'u32[144,128]{1,0:T(1,128)}', space=vmem, size = 0x12000, scoped, tag = 'internal scratch']
  %s0 = inlined_call_operand.vmem [shape: f32[2,32,256], index: 0, kind: input, shape index: {}]
  %s1 = inlined_call_operand.vmem [shape: f32[8,9], index: 1, kind: input, shape index: {}]
  %s2 = inlined_call_operand.vmem [shape: f32[8,21], index: 2, kind: input, shape index: {}]
  %s3 = inlined_call_operand.vmem [shape: f32[16,1], index: 3, kind: input, shape index: {}]
  %s4 = inlined_call_operand.vmem [shape: bf16[64,32], index: 4, kind: input, shape index: {}]
  %s5 = inlined_call_operand.vmem [shape: f32[64,1], index: 5, kind: input, shape index: {}]
  %s6 = inlined_call_operand.vmem [shape: bf16[32,64], index: 6, kind: input, shape index: {}]
  %s7 = inlined_call_operand.vmem [shape: f32[32,1], index: 7, kind: input, shape index: {}]
  %s8 = inlined_call_operand.vmem [shape: f32[2,32,256], index: 8, kind: output, shape index: {}]
  %s9 = sld [smem:[#allocation0]]
  $region65: #{metanext_block.1} parent=0
    _
  %s11 = ssub.s32 1, %s9
  %s12 = scalar_select 0, %s11, %s9
  loop: start=0, step=1, limit=4
  $region2: #{metanext_block.1} parent=0 // loop_pre_header
    _
  $region3: #{metanext_block.1} parent=0 // loop_header
    %s14 = sphi 0, %s18
    %p15 = scmp.ge.s32.totalorder %s14, 4
    %s24 = sphi 0, %s26
    %s27 = sphi 0, %s24
    %s28 = sphi 0, %s27
    %s44 = sphi 0, %s28
    %s48 = sphi 0, %s48
    %s50 = sphi 0, %s48
    %s51 = sphi 0, %s50
    %s65 = sphi 0, %s51
    %s69 = sphi 0, %s69
    %s71 = sphi 0, %s69
    %s72 = sphi 0, %s71
    %s86 = sphi 0, %s72
    %s90 = sphi 0, %s90
    %s92 = sphi 0, %s90
    %s93 = sphi 0, %s92
    %s107 = sphi 0, %s93
    %s111 = sphi 0, %s111
    %s113 = sphi 0, %s111
    %s114 = sphi 0, %s113
    %s128 = sphi 0, %s114
    %s132 = sphi 0, %s132
    %s134 = sphi 0, %s132
    %s135 = sphi 0, %s134
    %s149 = sphi 0, %s135
    %s153 = sphi 0, %s153
    %s155 = sphi 0, %s153
    %s156 = sphi 0, %s155
    %s170 = sphi 0, %s156
    %s174 = sphi 0, %s174
    %s176 = sphi 0, %s174
    %s177 = sphi 0, %s176
    %s191 = sphi 0, %s177
    %s197 = sphi 0, %s199
    %s200 = sphi 0, %s197
    %s201 = sphi 0, %s200
    %s217 = sphi 0, %s201
  $region4: #{metanext_block.1} parent=0 // loop_header_branch
    %17 = sbr.rel (%p15) target = $region8
  $region5: #{metanext_block.1} parent=0 // loop_body
    %s19 = ssub.s32 %s14, 1
    %s20 = ssub.s32 %s14, 2
    %s21 = sadd.s32 %s14, 1
    %s22 = ssub.s32 %s14, %s21
    %p23 = scmp.eq.s32.totalorder %s22, 0
    %s25 = sadd.s32 %s24, 1
    %s26 = scalar_select %p23, %s24, %s25
    %p29 = pneg %p23
    %p30 = scmp.eq.s32.totalorder %s14, 1
    %p31 = por %p29, %p30
    %p32 = scmp.ne.s32.totalorder %s24, %s27
    %p33 = scmp.eq.s32.totalorder %s14, 0
    %p34 = por %p32, %p33
    %p35 = scmp.ne.s32.totalorder %s24, %s27
    %p36 = scmp.eq.s32.totalorder %s19, 1
    %p37 = por %p35, %p36
    %p38 = scmp.ne.s32.totalorder %s27, %s28
    %p39 = scmp.eq.s32.totalorder %s19, 0
    %p40 = por %p38, %p39
    %p41 = scmp.ne.s32.totalorder %s27, %s28
    %p42 = scmp.eq.s32.totalorder %s20, 1
    %p43 = por %p41, %p42
    %p45 = scmp.ne.s32.totalorder %s28, %s44
    %p46 = scmp.eq.s32.totalorder %s20, 0
    %p47 = por %p45, %p46
    %s49 = sadd.s32 %s48, 1
    %p52 = scmp.eq.s32.totalorder %s14, 1
    %p53 = scmp.ne.s32.totalorder %s48, %s50
    %p54 = scmp.eq.s32.totalorder %s14, 0
    %p55 = por %p53, %p54
    %p56 = scmp.ne.s32.totalorder %s48, %s50
    %p57 = scmp.eq.s32.totalorder %s19, 1
    %p58 = por %p56, %p57
    %p59 = scmp.ne.s32.totalorder %s50, %s51
    %p60 = scmp.eq.s32.totalorder %s19, 0
    %p61 = por %p59, %p60
    %p62 = scmp.ne.s32.totalorder %s50, %s51
    %p63 = scmp.eq.s32.totalorder %s20, 1
    %p64 = por %p62, %p63
    %p66 = scmp.ne.s32.totalorder %s51, %s65
    %p67 = scmp.eq.s32.totalorder %s20, 0
    %p68 = por %p66, %p67
    %s70 = sadd.s32 %s69, 1
    %p73 = scmp.eq.s32.totalorder %s14, 1
    %p74 = scmp.ne.s32.totalorder %s69, %s71
    %p75 = scmp.eq.s32.totalorder %s14, 0
    %p76 = por %p74, %p75
    %p77 = scmp.ne.s32.totalorder %s69, %s71
    %p78 = scmp.eq.s32.totalorder %s19, 1
    %p79 = por %p77, %p78
    %p80 = scmp.ne.s32.totalorder %s71, %s72
    %p81 = scmp.eq.s32.totalorder %s19, 0
    %p82 = por %p80, %p81
    %p83 = scmp.ne.s32.totalorder %s71, %s72
    %p84 = scmp.eq.s32.totalorder %s20, 1
    %p85 = por %p83, %p84
    %p87 = scmp.ne.s32.totalorder %s72, %s86
    %p88 = scmp.eq.s32.totalorder %s20, 0
    %p89 = por %p87, %p88
    %s91 = sadd.s32 %s90, 1
    %p94 = scmp.eq.s32.totalorder %s14, 1
    %p95 = scmp.ne.s32.totalorder %s90, %s92
    %p96 = scmp.eq.s32.totalorder %s14, 0
    %p97 = por %p95, %p96
    %p98 = scmp.ne.s32.totalorder %s90, %s92
    %p99 = scmp.eq.s32.totalorder %s19, 1
    %p100 = por %p98, %p99
    %p101 = scmp.ne.s32.totalorder %s92, %s93
    %p102 = scmp.eq.s32.totalorder %s19, 0
    %p103 = por %p101, %p102
    %p104 = scmp.ne.s32.totalorder %s92, %s93
    %p105 = scmp.eq.s32.totalorder %s20, 1
    %p106 = por %p104, %p105
    %p108 = scmp.ne.s32.totalorder %s93, %s107
    %p109 = scmp.eq.s32.totalorder %s20, 0
    %p110 = por %p108, %p109
    %s112 = sadd.s32 %s111, 1
    %p115 = scmp.eq.s32.totalorder %s14, 1
    %p116 = scmp.ne.s32.totalorder %s111, %s113
    %p117 = scmp.eq.s32.totalorder %s14, 0
    %p118 = por %p116, %p117
    %p119 = scmp.ne.s32.totalorder %s111, %s113
    %p120 = scmp.eq.s32.totalorder %s19, 1
    %p121 = por %p119, %p120
    %p122 = scmp.ne.s32.totalorder %s113, %s114
    %p123 = scmp.eq.s32.totalorder %s19, 0
    %p124 = por %p122, %p123
    %p125 = scmp.ne.s32.totalorder %s113, %s114
    %p126 = scmp.eq.s32.totalorder %s20, 1
    %p127 = por %p125, %p126
    %p129 = scmp.ne.s32.totalorder %s114, %s128
    %p130 = scmp.eq.s32.totalorder %s20, 0
    %p131 = por %p129, %p130
    %s133 = sadd.s32 %s132, 1
    %p136 = scmp.eq.s32.totalorder %s14, 1
    %p137 = scmp.ne.s32.totalorder %s132, %s134
    %p138 = scmp.eq.s32.totalorder %s14, 0
    %p139 = por %p137, %p138
    %p140 = scmp.ne.s32.totalorder %s132, %s134
    %p141 = scmp.eq.s32.totalorder %s19, 1
    %p142 = por %p140, %p141
    %p143 = scmp.ne.s32.totalorder %s134, %s135
    %p144 = scmp.eq.s32.totalorder %s19, 0
    %p145 = por %p143, %p144
    %p146 = scmp.ne.s32.totalorder %s134, %s135
    %p147 = scmp.eq.s32.totalorder %s20, 1
    %p148 = por %p146, %p147
    %p150 = scmp.ne.s32.totalorder %s135, %s149
    %p151 = scmp.eq.s32.totalorder %s20, 0
    %p152 = por %p150, %p151
    %s154 = sadd.s32 %s153, 1
    %p157 = scmp.eq.s32.totalorder %s14, 1
    %p158 = scmp.ne.s32.totalorder %s153, %s155
    %p159 = scmp.eq.s32.totalorder %s14, 0
    %p160 = por %p158, %p159
    %p161 = scmp.ne.s32.totalorder %s153, %s155
    %p162 = scmp.eq.s32.totalorder %s19, 1
    %p163 = por %p161, %p162
    %p164 = scmp.ne.s32.totalorder %s155, %s156
    %p165 = scmp.eq.s32.totalorder %s19, 0
    %p166 = por %p164, %p165
    %p167 = scmp.ne.s32.totalorder %s155, %s156
    %p168 = scmp.eq.s32.totalorder %s20, 1
    %p169 = por %p167, %p168
    %p171 = scmp.ne.s32.totalorder %s156, %s170
    %p172 = scmp.eq.s32.totalorder %s20, 0
    %p173 = por %p171, %p172
    %s175 = sadd.s32 %s174, 1
    %p178 = scmp.eq.s32.totalorder %s14, 1
    %p179 = scmp.ne.s32.totalorder %s174, %s176
    %p180 = scmp.eq.s32.totalorder %s14, 0
    %p181 = por %p179, %p180
    %p182 = scmp.ne.s32.totalorder %s174, %s176
    %p183 = scmp.eq.s32.totalorder %s19, 1
    %p184 = por %p182, %p183
    %p185 = scmp.ne.s32.totalorder %s176, %s177
    %p186 = scmp.eq.s32.totalorder %s19, 0
    %p187 = por %p185, %p186
    %p188 = scmp.ne.s32.totalorder %s176, %s177
    %p189 = scmp.eq.s32.totalorder %s20, 1
    %p190 = por %p188, %p189
    %p192 = scmp.ne.s32.totalorder %s177, %s191
    %p193 = scmp.eq.s32.totalorder %s20, 0
    %p194 = por %p192, %p193
    %s195 = ssub.s32 %s14, %s21
    %p196 = scmp.eq.s32.totalorder %s195, 0
    %s198 = sadd.s32 %s197, 1
    %s199 = scalar_select %p196, %s197, %s198
    %p202 = pneg %p196
    %p203 = scmp.eq.s32.totalorder %s14, 1
    %p204 = por %p202, %p203
    %p205 = scmp.ne.s32.totalorder %s197, %s200
    %p206 = scmp.eq.s32.totalorder %s14, 0
    %p207 = por %p205, %p206
    %p208 = scmp.ne.s32.totalorder %s197, %s200
    %p209 = scmp.eq.s32.totalorder %s19, 1
    %p210 = por %p208, %p209
    %p211 = scmp.ne.s32.totalorder %s200, %s201
    %p212 = scmp.eq.s32.totalorder %s19, 0
    %p213 = por %p211, %p212
    %p214 = scmp.ne.s32.totalorder %s200, %s201
    %p215 = scmp.eq.s32.totalorder %s20, 1
    %p216 = por %p214, %p215
    %p218 = scmp.ne.s32.totalorder %s201, %s217
    %p219 = scmp.eq.s32.totalorder %s20, 0
    %p220 = por %p218, %p219
    %p221 = scmp.le.s32.totalorder 1, %s14
    %p222 = scmp.lt.s32.totalorder %s14, 3
    %p223 = pnand %p221, %p222
    %p224 = pneg %p223
    // Predicated region
    $region9: #{metanext_block.1} parent=5 // pred_check
      _
    $region10: #{metanext_block.1} parent=5 // pred_check_branch
      %226 = sbr.rel (%p223) target = $region12
    $region11: #{metanext_block.1} parent=5 // pred_region
      %s227 = ssub.s32 %s14, 1
      // Predicated region
      $region13: #{metanext_block.1} parent=11 // pred_check
        %p228 = pneg %p61
      $region14: #{metanext_block.1} parent=11 // pred_check_branch
        %230 = sbr.rel (%p228) target = $region16
      $region15: #{metanext_block.1} parent=11 // pred_region
        _
      $region16: #{metanext_block.1} parent=11 // pred_fallthru
        _
      // Predicated region
      $region17: #{metanext_block.1} parent=11 // pred_check
        %p231 = pneg %p82
      $region18: #{metanext_block.1} parent=11 // pred_check_branch
        %233 = sbr.rel (%p231) target = $region20
      $region19: #{metanext_block.1} parent=11 // pred_region
        _
      $region20: #{metanext_block.1} parent=11 // pred_fallthru
        _
      // Predicated region
      $region21: #{metanext_block.1} parent=11 // pred_check
        %p234 = pneg %p103
      $region22: #{metanext_block.1} parent=11 // pred_check_branch
        %236 = sbr.rel (%p234) target = $region24
      $region23: #{metanext_block.1} parent=11 // pred_region
        _
      $region24: #{metanext_block.1} parent=11 // pred_fallthru
        _
      // Predicated region
      $region25: #{metanext_block.1} parent=11 // pred_check
        %p237 = pneg %p124
      $region26: #{metanext_block.1} parent=11 // pred_check_branch
        %239 = sbr.rel (%p237) target = $region28
      $region27: #{metanext_block.1} parent=11 // pred_region
        _
      $region28: #{metanext_block.1} parent=11 // pred_fallthru
        _
      // Predicated region
      $region29: #{metanext_block.1} parent=11 // pred_check
        %p240 = pneg %p145
      $region30: #{metanext_block.1} parent=11 // pred_check_branch
        %242 = sbr.rel (%p240) target = $region32
      $region31: #{metanext_block.1} parent=11 // pred_region
        _
      $region32: #{metanext_block.1} parent=11 // pred_fallthru
        _
      // Predicated region
      $region33: #{metanext_block.1} parent=11 // pred_check
        %p243 = pneg %p166
      $region34: #{metanext_block.1} parent=11 // pred_check_branch
        %245 = sbr.rel (%p243) target = $region36
      $region35: #{metanext_block.1} parent=11 // pred_region
        _
      $region36: #{metanext_block.1} parent=11 // pred_fallthru
        _
      // Predicated region
      $region37: #{metanext_block.1} parent=11 // pred_check
        %p246 = pneg %p187
      $region38: #{metanext_block.1} parent=11 // pred_check_branch
        %248 = sbr.rel (%p246) target = $region40
      $region39: #{metanext_block.1} parent=11 // pred_region
        _
      $region40: #{metanext_block.1} parent=11 // pred_fallthru
        _
    $region12: #{metanext_block.1} parent=5 // pred_fallthru
      _
    %p249 = scmp.lt.s32.totalorder %s14, 2
    // Predicated region
    $region41: #{metanext_block.1} parent=5 // pred_check
      %p250 = pneg %p249
    $region42: #{metanext_block.1} parent=5 // pred_check_branch
      %252 = sbr.rel (%p250) target = $region44
    $region43: #{metanext_block.1} parent=5 // pred_region
      // Predicated region
      $region45: #{metanext_block.1} parent=43 // pred_check
        %p253 = pneg %p34
      $region46: #{metanext_block.1} parent=43 // pred_check_branch
        %255 = sbr.rel (%p253) target = $region48
      $region47: #{metanext_block.1} parent=43 // pred_region
        %p256 = scmp.lt.s32.totalorder %s14, 1
        %s257 = scalar_select %p256, %s14, 1
        %s258 = smul.addr %s257, 8
        %s259 = smul.addr %s258, 8
        %s260 = scalar_lea.vmem %s0, %s259
      $region48: #{metanext_block.1} parent=43 // pred_fallthru
        _
    $region44: #{metanext_block.1} parent=5 // pred_fallthru
      _
    %p261 = scmp.le.s32.totalorder 1, %s14
    %p262 = scmp.lt.s32.totalorder %s14, 3
    %p263 = pnand %p261, %p262
    %p264 = pneg %p263
    // Predicated region
    $region49: #{metanext_block.1} parent=5 // pred_check
      _
    $region50: #{metanext_block.1} parent=5 // pred_check_branch
      %266 = sbr.rel (%p263) target = $region52
    $region51: #{metanext_block.1} parent=5 // pred_region
      %s267 = ssub.s32 %s14, 1
      %p268 = scmp.lt.s32.totalorder %s19, 1
      %s269 = scalar_select %p268, %s19, 1
      %s270 = smul.addr %s269, 8
      %s271 = smul.addr %s270, 8
      %s272 = scalar_lea.vmem %s0, %s271
      %p273 = pneg %p40
      %p274 = pneg %p37
      %p275 = pneg %p61
      %p276 = pneg %p58
      %p277 = pneg %p82
      %p278 = pneg %p79
      %p279 = pneg %p103
      %p280 = pneg %p100
      %p281 = pneg %p124
      %p282 = pneg %p121
      %p283 = pneg %p145
      %p284 = pneg %p142
      %p285 = pneg %p166
      %p286 = pneg %p163
      %p287 = pneg %p187
      %p288 = pneg %p184
      %p289 = pneg %p213
      %p290 = pneg %p210
      %p291 = scmp.lt.s32.totalorder %s19, 1
      %s292 = scalar_select %p291, %s19, 1
      %s293 = smul.addr %s292, 8
      %s294 = smul.addr %s293, 8
      %s295 = scalar_lea.vmem %s8, %s294
      %p296 = scmp.lt.s32.totalorder %s19, 1
      %s297 = scalar_select %p296, %s19, 1
      %s298 = smul.addr %s297, 8
      %s299 = smul.addr %s298, 8
      %s300 = scalar_lea.vmem %s0, %s299
      %p301 = scmp.lt.s32.totalorder %s19, 1
      %s302 = scalar_select %p301, %s19, 1
      %s303 = smul.addr %s302, 8
      %s304 = smul.addr %s303, 8
      %s305 = scalar_lea.vmem %s8, %s304
      %v307 = vld [vmem:[%s300] sm:$0xff]
      %v308 = vld [vmem:[%s300 + $0x8] sm:$0xff]
      %v309 = vld [vmem:[%s300 + $0x10] sm:$0xff]
      %v310 = vld [vmem:[%s300 + $0x18] sm:$0xff]
      %v311 = vld [vmem:[%s300 + $0x20] sm:$0xff]
      %v312 = vld [vmem:[%s300 + $0x28] sm:$0xff]
      %v313 = vld [vmem:[%s300 + $0x30] sm:$0xff]
      %v314 = vld [vmem:[%s300 + $0x38] sm:$0xff]
      %v315 = vlaneseq
      %v316 = vand.u32 %v315, 127
      %v317 = vadd.s32 %v316, 128
      %v318 = vand.u32 %v316, 15
      %v319 = vand.u32 %v317, 15
      %v320 = vld [vmem:[%s1] sm:$0xff]
      %v321 = vld [vmem:[%s2] sm:$0xff]
      %322 = vrot.lane.b32.xlu0 %v311, 17
      %v323 = vpop.permute.xlu0 %322
      %324 = vrot.lane.b32.xlu0 %v312, 17
      %v325 = vpop.permute.xlu0 %324
      %vm326 = vcmp.lt.s32.totalorder %v316, 17
      %v327 = vsel %vm326, %v323, %v325
      %v328 = vsel %vm326, %v325, %v323
      %vm329 = vcmp.ge.s32.totalorder %v318, 1
      %vm330 = vcmp.ge.s32.totalorder %v319, 1
      %v331 = vsel %vm329, 1, 0
      %v332 = vsel %vm330, 1, 0
      %v333 = vcvt.s32.f32 %v331
      %v334 = vcvt.s32.f32 %v332
      %v335 = vmul.f32 %v328, %v333
      %v336 = vmul.f32 %v327, %v334
      %338 = vset.pattern.permute.xlu0 0
      %339 = vperm.xlu0 %338, %v320
      %v340 = vpop.permute.xlu0 %339
      %v342 = vmul.f32 %v335, %v340
      %v343 = vmul.f32 %v336, %v340
      %344 = vrot.lane.b32.xlu0 %v311, 16
      %v345 = vpop.permute.xlu0 %344
      %346 = vrot.lane.b32.xlu0 %v312, 16
      %v347 = vpop.permute.xlu0 %346
      %vm348 = vcmp.lt.s32.totalorder %v316, 16
      %v349 = vsel %vm348, %v345, %v347
      %v350 = vsel %vm348, %v347, %v345
      %351 = vset.pattern.permute.xlu0 1
      %352 = vperm.xlu0 %351, %v320
      %v353 = vpop.permute.xlu0 %352
      %v355 = vmul.f32 %v350, %v353
      %v356 = vmul.f32 %v349, %v353
      %v357 = vadd.f32 %v342, %v355
      %v358 = vadd.f32 %v343, %v356
      %359 = vrot.lane.b32.xlu0 %v311, 15
      %v360 = vpop.permute.xlu0 %359
      %361 = vrot.lane.b32.xlu0 %v312, 15
      %v362 = vpop.permute.xlu0 %361
      %vm363 = vcmp.lt.s32.totalorder %v316, 15
      %v364 = vsel %vm363, %v360, %v362
      %v365 = vsel %vm363, %v362, %v360
      %vm366 = vcmp.lt.s32.totalorder %v318, 15
      %vm367 = vcmp.lt.s32.totalorder %v319, 15
      %v368 = vsel %vm366, 1, 0
      %v369 = vsel %vm367, 1, 0
      %v370 = vcvt.s32.f32 %v368
      %v371 = vcvt.s32.f32 %v369
      %v372 = vmul.f32 %v365, %v370
      %v373 = vmul.f32 %v364, %v371
      %374 = vset.pattern.permute.xlu0 2
      %375 = vperm.xlu0 %374, %v320
      %v376 = vpop.permute.xlu0 %375
      %v378 = vmul.f32 %v372, %v376
      %v379 = vmul.f32 %v373, %v376
      %v380 = vadd.f32 %v357, %v378
      %v381 = vadd.f32 %v358, %v379
      %vm382 = vcmp.ge.s32.totalorder %v316, 16
      %vm383 = vcmp.ge.s32.totalorder %v317, 16
      %v384 = vsel %vm382, 1, 0
      %v385 = vsel %vm383, 1, 0
      %v386 = vcvt.s32.f32 %v384
      %v387 = vcvt.s32.f32 %v385
      %v388 = vmul.f32 %v380, %v386
      %v389 = vmul.f32 %v381, %v387
      %390 = vrot.lane.b32.xlu0 %v311, 1
      %v391 = vpop.permute.xlu0 %390
      %392 = vrot.lane.b32.xlu0 %v312, 1
      %v393 = vpop.permute.xlu0 %392
      %vm394 = vcmp.lt.s32.totalorder %v316, 1
      %v395 = vsel %vm394, %v391, %v393
      %v396 = vsel %vm394, %v393, %v391
      %v397 = vmul.f32 %v396, %v333
      %v398 = vmul.f32 %v395, %v334
      %399 = vset.pattern.permute.xlu0 3
      %400 = vperm.xlu0 %399, %v320
      %v401 = vpop.permute.xlu0 %400
      %v403 = vmul.f32 %v397, %v401
      %v404 = vmul.f32 %v398, %v401
      %405 = vset.pattern.permute.xlu0 4
      %406 = vperm.xlu0 %405, %v320
      %v407 = vpop.permute.xlu0 %406
      %v409 = vmul.f32 %v311, %v407
      %v410 = vmul.f32 %v312, %v407
      %v411 = vadd.f32 %v403, %v409
      %v412 = vadd.f32 %v404, %v410
      %413 = vrot.lane.b32.xlu0 %v311, 127
      %v414 = vpop.permute.xlu0 %413
      %415 = vrot.lane.b32.xlu0 %v312, 127
      %v416 = vpop.permute.xlu0 %415
      %vm417 = vcmp.lt.s32.totalorder %v316, 127
      %v418 = vsel %vm417, %v414, %v416
      %v419 = vsel %vm417, %v416, %v414
      %v420 = vmul.f32 %v418, %v370
      %v421 = vmul.f32 %v419, %v371
      %422 = vset.pattern.permute.xlu0 5
      %423 = vperm.xlu0 %422, %v320
      %v424 = vpop.permute.xlu0 %423
      %v426 = vmul.f32 %v420, %v424
      %v427 = vmul.f32 %v421, %v424
      %v428 = vadd.f32 %v411, %v426
      %v429 = vadd.f32 %v412, %v427
      %v430 = vadd.f32 %v388, %v428
      %v431 = vadd.f32 %v389, %v429
      %432 = vrot.lane.b32.xlu0 %v311, 113
      %v433 = vpop.permute.xlu0 %432
      %434 = vrot.lane.b32.xlu0 %v312, 113
      %v435 = vpop.permute.xlu0 %434
      %vm436 = vcmp.lt.s32.totalorder %v316, 113
      %v437 = vsel %vm436, %v433, %v435
      %v438 = vsel %vm436, %v435, %v433
      %v439 = vmul.f32 %v437, %v333
      %v440 = vmul.f32 %v438, %v334
      %441 = vset.pattern.permute.xlu0 6
      %442 = vperm.xlu0 %441, %v320
      %v443 = vpop.permute.xlu0 %442
      %v445 = vmul.f32 %v439, %v443
      %v446 = vmul.f32 %v440, %v443
      %447 = vrot.lane.b32.xlu0 %v311, 112
      %v448 = vpop.permute.xlu0 %447
      %449 = vrot.lane.b32.xlu0 %v312, 112
      %v450 = vpop.permute.xlu0 %449
      %vm451 = vcmp.lt.s32.totalorder %v316, 112
      %v452 = vsel %vm451, %v448, %v450
      %v453 = vsel %vm451, %v450, %v448
      %454 = vset.pattern.permute.xlu0 7
      %455 = vperm.xlu0 %454, %v320
      %v456 = vpop.permute.xlu0 %455
      %v458 = vmul.f32 %v452, %v456
      %v459 = vmul.f32 %v453, %v456
      %v460 = vadd.f32 %v445, %v458
      %v461 = vadd.f32 %v446, %v459
      %462 = vrot.lane.b32.xlu0 %v311, 111
      %v463 = vpop.permute.xlu0 %462
      %464 = vrot.lane.b32.xlu0 %v312, 111
      %v465 = vpop.permute.xlu0 %464
      %vm466 = vcmp.lt.s32.totalorder %v316, 111
      %v467 = vsel %vm466, %v463, %v465
      %v468 = vsel %vm466, %v465, %v463
      %v469 = vmul.f32 %v467, %v370
      %v470 = vmul.f32 %v468, %v371
      %471 = vset.pattern.permute.xlu0 8
      %472 = vperm.xlu0 %471, %v320
      %v473 = vpop.permute.xlu0 %472
      %v475 = vmul.f32 %v469, %v473
      %v476 = vmul.f32 %v470, %v473
      %v477 = vadd.f32 %v460, %v475
      %v478 = vadd.f32 %v461, %v476
      %vm479 = vcmp.lt.s32.totalorder %v316, 240
      %vm480 = vcmp.lt.s32.totalorder %v317, 240
      %v481 = vsel %vm479, 1, 0
      %v482 = vsel %vm480, 1, 0
      %v483 = vcvt.s32.f32 %v481
      %v484 = vcvt.s32.f32 %v482
      %v485 = vmul.f32 %v477, %v483
      %v486 = vmul.f32 %v478, %v484
      %v487 = vadd.f32 %v430, %v485
      %v488 = vadd.f32 %v431, %v486
      %489 = vrot.lane.b32.xlu0 %v313, 80
      %v490 = vpop.permute.xlu0 %489
      %491 = vrot.lane.b32.xlu0 %v314, 80
      %v492 = vpop.permute.xlu0 %491
      %vm493 = vcmp.lt.s32.totalorder %v316, 80
      %v494 = vsel %vm493, %v490, %v492
      %v495 = vsel %vm493, %v492, %v490
      %vm496 = vcmp.ge.s32.totalorder %v316, 80
      %vm497 = vcmp.ge.s32.totalorder %v317, 80
      %v498 = vsel %vm496, 1, 0
      %v499 = vsel %vm497, 1, 0
      %v500 = vcvt.s32.f32 %v498
      %v501 = vcvt.s32.f32 %v499
      %v502 = vmul.f32 %v495, %v500
      %v503 = vmul.f32 %v494, %v501
      %505 = vset.pattern.permute.xlu0 0
      %506 = vperm.xlu0 %505, %v321
      %v507 = vpop.permute.xlu0 %506
      %v509 = vmul.f32 %v502, %v507
      %v510 = vmul.f32 %v503, %v507
      %511 = vrot.lane.b32.xlu0 %v313, 64
      %v512 = vpop.permute.xlu0 %511
      %513 = vrot.lane.b32.xlu0 %v314, 64
      %v514 = vpop.permute.xlu0 %513
      %vm515 = vcmp.lt.s32.totalorder %v316, 64
      %v516 = vsel %vm515, %v512, %v514
      %v517 = vsel %vm515, %v514, %v512
      %vm518 = vcmp.ge.s32.totalorder %v316, 64
      %vm519 = vcmp.ge.s32.totalorder %v317, 64
      %v520 = vsel %vm518, 1, 0
      %v521 = vsel %vm519, 1, 0
      %v522 = vcvt.s32.f32 %v520
      %v523 = vcvt.s32.f32 %v521
      %v524 = vmul.f32 %v517, %v522
      %v525 = vmul.f32 %v516, %v523
      %526 = vset.pattern.permute.xlu0 1
      %527 = vperm.xlu0 %526, %v321
      %v528 = vpop.permute.xlu0 %527
      %v530 = vmul.f32 %v524, %v528
      %v531 = vmul.f32 %v525, %v528
      %v532 = vadd.f32 %v509, %v530
      %v533 = vadd.f32 %v510, %v531
      %534 = vrot.lane.b32.xlu0 %v313, 48
      %v535 = vpop.permute.xlu0 %534
      %536 = vrot.lane.b32.xlu0 %v314, 48
      %v537 = vpop.permute.xlu0 %536
      %vm538 = vcmp.lt.s32.totalorder %v316, 48
      %v539 = vsel %vm538, %v535, %v537
      %v540 = vsel %vm538, %v537, %v535
      %vm541 = vcmp.ge.s32.totalorder %v316, 48
      %vm542 = vcmp.ge.s32.totalorder %v317, 48
      %v543 = vsel %vm541, 1, 0
      %v544 = vsel %vm542, 1, 0
      %v545 = vcvt.s32.f32 %v543
      %v546 = vcvt.s32.f32 %v544
      %v547 = vmul.f32 %v540, %v545
      %v548 = vmul.f32 %v539, %v546
      %549 = vset.pattern.permute.xlu0 2
      %550 = vperm.xlu0 %549, %v321
      %v551 = vpop.permute.xlu0 %550
      %v553 = vmul.f32 %v547, %v551
      %v554 = vmul.f32 %v548, %v551
      %v555 = vadd.f32 %v532, %v553
      %v556 = vadd.f32 %v533, %v554
      %557 = vrot.lane.b32.xlu0 %v313, 32
      %v558 = vpop.permute.xlu0 %557
      %559 = vrot.lane.b32.xlu0 %v314, 32
      %v560 = vpop.permute.xlu0 %559
      %vm561 = vcmp.lt.s32.totalorder %v316, 32
      %v562 = vsel %vm561, %v558, %v560
      %v563 = vsel %vm561, %v560, %v558
      %vm564 = vcmp.ge.s32.totalorder %v316, 32
      %vm565 = vcmp.ge.s32.totalorder %v317, 32
      %v566 = vsel %vm564, 1, 0
      %v567 = vsel %vm565, 1, 0
      %v568 = vcvt.s32.f32 %v566
      %v569 = vcvt.s32.f32 %v567
      %v570 = vmul.f32 %v563, %v568
      %v571 = vmul.f32 %v562, %v569
      %572 = vset.pattern.permute.xlu0 3
      %573 = vperm.xlu0 %572, %v321
      %v574 = vpop.permute.xlu0 %573
      %v576 = vmul.f32 %v570, %v574
      %v577 = vmul.f32 %v571, %v574
      %v578 = vadd.f32 %v555, %v576
      %v579 = vadd.f32 %v556, %v577
      %580 = vrot.lane.b32.xlu0 %v313, 16
      %v581 = vpop.permute.xlu0 %580
      %582 = vrot.lane.b32.xlu0 %v314, 16
      %v583 = vpop.permute.xlu0 %582
      %v584 = vsel %vm348, %v581, %v583
      %v585 = vsel %vm348, %v583, %v581
      %v586 = vmul.f32 %v585, %v386
      %v587 = vmul.f32 %v584, %v387
      %588 = vset.pattern.permute.xlu0 4
      %589 = vperm.xlu0 %588, %v321
      %v590 = vpop.permute.xlu0 %589
      %v592 = vmul.f32 %v586, %v590
      %v593 = vmul.f32 %v587, %v590
      %v594 = vadd.f32 %v578, %v592
      %v595 = vadd.f32 %v579, %v593
      %596 = vrot.lane.b32.xlu0 %v313, 5
      %v597 = vpop.permute.xlu0 %596
      %598 = vrot.lane.b32.xlu0 %v314, 5
      %v599 = vpop.permute.xlu0 %598
      %vm600 = vcmp.lt.s32.totalorder %v316, 5
      %v601 = vsel %vm600, %v597, %v599
      %v602 = vsel %vm600, %v599, %v597
      %vm603 = vcmp.ge.s32.totalorder %v318, 5
      %vm604 = vcmp.ge.s32.totalorder %v319, 5
      %v605 = vsel %vm603, 1, 0
      %v606 = vsel %vm604, 1, 0
      %v607 = vcvt.s32.f32 %v605
      %v608 = vcvt.s32.f32 %v606
      %v609 = vmul.f32 %v602, %v607
      %v610 = vmul.f32 %v601, %v608
      %611 = vset.pattern.permute.xlu0 5
      %612 = vperm.xlu0 %611, %v321
      %v613 = vpop.permute.xlu0 %612
      %v615 = vmul.f32 %v609, %v613
      %v616 = vmul.f32 %v610, %v613
      %v617 = vadd.f32 %v594, %v615
      %v618 = vadd.f32 %v595, %v616
      %619 = vrot.lane.b32.xlu0 %v313, 4
      %v620 = vpop.permute.xlu0 %619
      %621 = vrot.lane.b32.xlu0 %v314, 4
      %v622 = vpop.permute.xlu0 %621
      %vm623 = vcmp.lt.s32.totalorder %v316, 4
      %v624 = vsel %vm623, %v620, %v622
      %v625 = vsel %vm623, %v622, %v620
      %vm626 = vcmp.ge.s32.totalorder %v318, 4
      %vm627 = vcmp.ge.s32.totalorder %v319, 4
      %v628 = vsel %vm626, 1, 0
      %v629 = vsel %vm627, 1, 0
      %v630 = vcvt.s32.f32 %v628
      %v631 = vcvt.s32.f32 %v629
      %v632 = vmul.f32 %v625, %v630
      %v633 = vmul.f32 %v624, %v631
      %634 = vset.pattern.permute.xlu0 6
      %635 = vperm.xlu0 %634, %v321
      %v636 = vpop.permute.xlu0 %635
      %v638 = vmul.f32 %v632, %v636
      %v639 = vmul.f32 %v633, %v636
      %v640 = vadd.f32 %v617, %v638
      %v641 = vadd.f32 %v618, %v639
      %642 = vrot.lane.b32.xlu0 %v313, 3
      %v643 = vpop.permute.xlu0 %642
      %644 = vrot.lane.b32.xlu0 %v314, 3
      %v645 = vpop.permute.xlu0 %644
      %vm646 = vcmp.lt.s32.totalorder %v316, 3
      %v647 = vsel %vm646, %v643, %v645
      %v648 = vsel %vm646, %v645, %v643
      %vm649 = vcmp.ge.s32.totalorder %v318, 3
      %vm650 = vcmp.ge.s32.totalorder %v319, 3
      %v651 = vsel %vm649, 1, 0
      %v652 = vsel %vm650, 1, 0
      %v653 = vcvt.s32.f32 %v651
      %v654 = vcvt.s32.f32 %v652
      %v655 = vmul.f32 %v648, %v653
      %v656 = vmul.f32 %v647, %v654
      %657 = vset.pattern.permute.xlu0 7
      %658 = vperm.xlu0 %657, %v321
      %v659 = vpop.permute.xlu0 %658
      %v661 = vmul.f32 %v655, %v659
      %v662 = vmul.f32 %v656, %v659
      %v663 = vadd.f32 %v640, %v661
      %v664 = vadd.f32 %v641, %v662
      %665 = vrot.lane.b32.xlu0 %v313, 2
      %v666 = vpop.permute.xlu0 %665
      %667 = vrot.lane.b32.xlu0 %v314, 2
      %v668 = vpop.permute.xlu0 %667
      %vm669 = vcmp.lt.s32.totalorder %v316, 2
      %v670 = vsel %vm669, %v666, %v668
      %v671 = vsel %vm669, %v668, %v666
      %vm672 = vcmp.ge.s32.totalorder %v318, 2
      %vm673 = vcmp.ge.s32.totalorder %v319, 2
      %v674 = vsel %vm672, 1, 0
      %v675 = vsel %vm673, 1, 0
      %v676 = vcvt.s32.f32 %v674
      %v677 = vcvt.s32.f32 %v675
      %v678 = vmul.f32 %v671, %v676
      %v679 = vmul.f32 %v670, %v677
      %680 = vset.pattern.permute.xlu0 8
      %681 = vperm.xlu0 %680, %v321
      %v682 = vpop.permute.xlu0 %681
      %v684 = vmul.f32 %v678, %v682
      %v685 = vmul.f32 %v679, %v682
      %v686 = vadd.f32 %v663, %v684
      %v687 = vadd.f32 %v664, %v685
      %688 = vrot.lane.b32.xlu0 %v313, 1
      %v689 = vpop.permute.xlu0 %688
      %690 = vrot.lane.b32.xlu0 %v314, 1
      %v691 = vpop.permute.xlu0 %690
      %v692 = vsel %vm394, %v689, %v691
      %v693 = vsel %vm394, %v691, %v689
      %v694 = vmul.f32 %v693, %v333
      %v695 = vmul.f32 %v692, %v334
      %696 = vset.pattern.permute.xlu0 9
      %697 = vperm.xlu0 %696, %v321
      %v698 = vpop.permute.xlu0 %697
      %v700 = vmul.f32 %v694, %v698
      %v701 = vmul.f32 %v695, %v698
      %v702 = vadd.f32 %v686, %v700
      %v703 = vadd.f32 %v687, %v701
      %704 = vset.pattern.permute.xlu0 10
      %705 = vperm.xlu0 %704, %v321
      %v706 = vpop.permute.xlu0 %705
      %v708 = vmul.f32 %v313, %v706
      %v709 = vmul.f32 %v314, %v706
      %v710 = vadd.f32 %v702, %v708
      %v711 = vadd.f32 %v703, %v709
      %712 = vrot.lane.b32.xlu0 %v313, 127
      %v713 = vpop.permute.xlu0 %712
      %714 = vrot.lane.b32.xlu0 %v314, 127
      %v715 = vpop.permute.xlu0 %714
      %v716 = vsel %vm417, %v713, %v715
      %v717 = vsel %vm417, %v715, %v713
      %v718 = vmul.f32 %v716, %v370
      %v719 = vmul.f32 %v717, %v371
      %720 = vset.pattern.permute.xlu0 11
      %721 = vperm.xlu0 %720, %v321
      %v722 = vpop.permute.xlu0 %721
      %v724 = vmul.f32 %v718, %v722
      %v725 = vmul.f32 %v719, %v722
      %v726 = vadd.f32 %v710, %v724
      %v727 = vadd.f32 %v711, %v725
      %728 = vrot.lane.b32.xlu0 %v313, 126
      %v729 = vpop.permute.xlu0 %728
      %730 = vrot.lane.b32.xlu0 %v314, 126
      %v731 = vpop.permute.xlu0 %730
      %vm732 = vcmp.lt.s32.totalorder %v316, 126
      %v733 = vsel %vm732, %v729, %v731
      %v734 = vsel %vm732, %v731, %v729
      %vm735 = vcmp.lt.s32.totalorder %v318, 14
      %vm736 = vcmp.lt.s32.totalorder %v319, 14
      %v737 = vsel %vm735, 1, 0
      %v738 = vsel %vm736, 1, 0
      %v739 = vcvt.s32.f32 %v737
      %v740 = vcvt.s32.f32 %v738
      %v741 = vmul.f32 %v733, %v739
      %v742 = vmul.f32 %v734, %v740
      %743 = vset.pattern.permute.xlu0 12
      %744 = vperm.xlu0 %743, %v321
      %v745 = vpop.permute.xlu0 %744
      %v747 = vmul.f32 %v741, %v745
      %v748 = vmul.f32 %v742, %v745
      %v749 = vadd.f32 %v726, %v747
      %v750 = vadd.f32 %v727, %v748
      %751 = vrot.lane.b32.xlu0 %v313, 125
      %v752 = vpop.permute.xlu0 %751
      %753 = vrot.lane.b32.xlu0 %v314, 125
      %v754 = vpop.permute.xlu0 %753
      %vm755 = vcmp.lt.s32.totalorder %v316, 125
      %v756 = vsel %vm755, %v752, %v754
      %v757 = vsel %vm755, %v754, %v752
      %vm758 = vcmp.lt.s32.totalorder %v318, 13
      %vm759 = vcmp.lt.s32.totalorder %v319, 13
      %v760 = vsel %vm758, 1, 0
      %v761 = vsel %vm759, 1, 0
      %v762 = vcvt.s32.f32 %v760
      %v763 = vcvt.s32.f32 %v761
      %v764 = vmul.f32 %v756, %v762
      %v765 = vmul.f32 %v757, %v763
      %766 = vset.pattern.permute.xlu0 13
      %767 = vperm.xlu0 %766, %v321
      %v768 = vpop.permute.xlu0 %767
      %v770 = vmul.f32 %v764, %v768
      %v771 = vmul.f32 %v765, %v768
      %v772 = vadd.f32 %v749, %v770
      %v773 = vadd.f32 %v750, %v771
      %774 = vrot.lane.b32.xlu0 %v313, 124
      %v775 = vpop.permute.xlu0 %774
      %776 = vrot.lane.b32.xlu0 %v314, 124
      %v777 = vpop.permute.xlu0 %776
      %vm778 = vcmp.lt.s32.totalorder %v316, 124
      %v779 = vsel %vm778, %v775, %v777
      %v780 = vsel %vm778, %v777, %v775
      %vm781 = vcmp.lt.s32.totalorder %v318, 12
      %vm782 = vcmp.lt.s32.totalorder %v319, 12
      %v783 = vsel %vm781, 1, 0
      %v784 = vsel %vm782, 1, 0
      %v785 = vcvt.s32.f32 %v783
      %v786 = vcvt.s32.f32 %v784
      %v787 = vmul.f32 %v779, %v785
      %v788 = vmul.f32 %v780, %v786
      %789 = vset.pattern.permute.xlu0 14
      %790 = vperm.xlu0 %789, %v321
      %v791 = vpop.permute.xlu0 %790
      %v793 = vmul.f32 %v787, %v791
      %v794 = vmul.f32 %v788, %v791
      %v795 = vadd.f32 %v772, %v793
      %v796 = vadd.f32 %v773, %v794
      %797 = vrot.lane.b32.xlu0 %v313, 123
      %v798 = vpop.permute.xlu0 %797
      %799 = vrot.lane.b32.xlu0 %v314, 123
      %v800 = vpop.permute.xlu0 %799
      %vm801 = vcmp.lt.s32.totalorder %v316, 123
      %v802 = vsel %vm801, %v798, %v800
      %v803 = vsel %vm801, %v800, %v798
      %vm804 = vcmp.lt.s32.totalorder %v318, 11
      %vm805 = vcmp.lt.s32.totalorder %v319, 11
      %v806 = vsel %vm804, 1, 0
      %v807 = vsel %vm805, 1, 0
      %v808 = vcvt.s32.f32 %v806
      %v809 = vcvt.s32.f32 %v807
      %v810 = vmul.f32 %v802, %v808
      %v811 = vmul.f32 %v803, %v809
      %812 = vset.pattern.permute.xlu0 15
      %813 = vperm.xlu0 %812, %v321
      %v814 = vpop.permute.xlu0 %813
      %v816 = vmul.f32 %v810, %v814
      %v817 = vmul.f32 %v811, %v814
      %v818 = vadd.f32 %v795, %v816
      %v819 = vadd.f32 %v796, %v817
      %820 = vrot.lane.b32.xlu0 %v313, 112
      %v821 = vpop.permute.xlu0 %820
      %822 = vrot.lane.b32.xlu0 %v314, 112
      %v823 = vpop.permute.xlu0 %822
      %v824 = vsel %vm451, %v821, %v823
      %v825 = vsel %vm451, %v823, %v821
      %v826 = vmul.f32 %v824, %v483
      %v827 = vmul.f32 %v825, %v484
      %828 = vset.pattern.permute.xlu0 16
      %829 = vperm.xlu0 %828, %v321
      %v830 = vpop.permute.xlu0 %829
      %v832 = vmul.f32 %v826, %v830
      %v833 = vmul.f32 %v827, %v830
      %v834 = vadd.f32 %v818, %v832
      %v835 = vadd.f32 %v819, %v833
      %836 = vrot.lane.b32.xlu0 %v313, 96
      %v837 = vpop.permute.xlu0 %836
      %838 = vrot.lane.b32.xlu0 %v314, 96
      %v839 = vpop.permute.xlu0 %838
      %vm840 = vcmp.lt.s32.totalorder %v316, 96
      %v841 = vsel %vm840, %v837, %v839
      %v842 = vsel %vm840, %v839, %v837
      %vm843 = vcmp.lt.s32.totalorder %v316, 224
      %vm844 = vcmp.lt.s32.totalorder %v317, 224
      %v845 = vsel %vm843, 1, 0
      %v846 = vsel %vm844, 1, 0
      %v847 = vcvt.s32.f32 %v845
      %v848 = vcvt.s32.f32 %v846
      %v849 = vmul.f32 %v841, %v847
      %v850 = vmul.f32 %v842, %v848
      %851 = vset.pattern.permute.xlu0 17
      %852 = vperm.xlu0 %851, %v321
      %v853 = vpop.permute.xlu0 %852
      %v855 = vmul.f32 %v849, %v853
      %v856 = vmul.f32 %v850, %v853
      %v857 = vadd.f32 %v834, %v855
      %v858 = vadd.f32 %v835, %v856
      %vm859 = vcmp.lt.s32.totalorder %v316, 208
      %vm860 = vcmp.lt.s32.totalorder %v317, 208
      %v861 = vsel %vm859, 1, 0
      %v862 = vsel %vm860, 1, 0
      %v863 = vcvt.s32.f32 %v861
      %v864 = vcvt.s32.f32 %v862
      %v865 = vmul.f32 %v494, %v863
      %v866 = vmul.f32 %v495, %v864
      %867 = vset.pattern.permute.xlu0 18
      %868 = vperm.xlu0 %867, %v321
      %v869 = vpop.permute.xlu0 %868
      %v871 = vmul.f32 %v865, %v869
      %v872 = vmul.f32 %v866, %v869
      %v873 = vadd.f32 %v857, %v871
      %v874 = vadd.f32 %v858, %v872
      %vm875 = vcmp.lt.s32.totalorder %v316, 192
      %vm876 = vcmp.lt.s32.totalorder %v317, 192
      %v877 = vsel %vm875, 1, 0
      %v878 = vsel %vm876, 1, 0
      %v879 = vcvt.s32.f32 %v877
      %v880 = vcvt.s32.f32 %v878
      %v881 = vmul.f32 %v516, %v879
      %v882 = vmul.f32 %v517, %v880
      %883 = vset.pattern.permute.xlu0 19
      %884 = vperm.xlu0 %883, %v321
      %v885 = vpop.permute.xlu0 %884
      %v887 = vmul.f32 %v881, %v885
      %v888 = vmul.f32 %v882, %v885
      %v889 = vadd.f32 %v873, %v887
      %v890 = vadd.f32 %v874, %v888
      %vm891 = vcmp.lt.s32.totalorder %v316, 176
      %vm892 = vcmp.lt.s32.totalorder %v317, 176
      %v893 = vsel %vm891, 1, 0
      %v894 = vsel %vm892, 1, 0
      %v895 = vcvt.s32.f32 %v893
      %v896 = vcvt.s32.f32 %v894
      %v897 = vmul.f32 %v539, %v895
      %v898 = vmul.f32 %v540, %v896
      %899 = vset.pattern.permute.xlu0 20
      %900 = vperm.xlu0 %899, %v321
      %v901 = vpop.permute.xlu0 %900
      %v903 = vmul.f32 %v897, %v901
      %v904 = vmul.f32 %v898, %v901
      %v905 = vadd.f32 %v889, %v903
      %v906 = vadd.f32 %v890, %v904
      %v907 = vld [vmem:[%s3] sm:$0xff]
      %v908 = vld [vmem:[%s3 + $0x8] sm:$0xff]
      %910 = vset.pattern.permute.xlu0 0
      %911 = vperm.xlu0 %910, %v907
      %v912 = vpop.permute.xlu0 %911
      %915 = vset.pattern.permute.xlu0 0
      %916 = vperm.xlu0 %915, %v908
      %v917 = vpop.permute.xlu0 %916
      %v919 = vadd.f32 %v487, %v912
      %v920 = vadd.f32 %v488, %v912
      %v921 = vadd.f32 %v905, %v917
      %v922 = vadd.f32 %v906, %v917
      %v923 = vadd.f32 %v307, %v309
      %v924 = vadd.f32 %v923, %v919
      %v925 = vadd.f32 %v924, %v921
      %v926 = vrot.slane %v925, 4
      %v927 = vadd.f32 %v925, %v926
      %v928 = vrot.slane %v927, 2
      %v929 = vadd.f32 %v927, %v928
      %v930 = vrot.slane %v929, 1
      %v931 = vadd.f32 %v929, %v930
      %v932 = vadd.f32 %v308, %v310
      %v933 = vadd.f32 %v932, %v920
      %v934 = vadd.f32 %v933, %v922
      %v935 = vrot.slane %v934, 4
      %v936 = vadd.f32 %v934, %v935
      %v937 = vrot.slane %v936, 2
      %v938 = vadd.f32 %v936, %v937
      %v939 = vrot.slane %v938, 1
      %v940 = vadd.f32 %v938, %v939
      %v941 = vrcp.pop 32.0
      %v942 = vmul.f32 %v931, %v941
      %v943 = vmul.f32 %v940, %v941
      %v944 = vsub.f32 %v307, %v942
      %v945 = vsub.f32 %v308, %v943
      %v946 = vsub.f32 %v309, %v942
      %v947 = vsub.f32 %v310, %v943
      %v948 = vsub.f32 %v919, %v942
      %v949 = vsub.f32 %v920, %v943
      %v950 = vsub.f32 %v921, %v942
      %v951 = vsub.f32 %v922, %v943
      %v952 = vmul.f32 %v944, %v944
      %v953 = vmul.f32 %v945, %v945
      %v954 = vmul.f32 %v946, %v946
      %v955 = vmul.f32 %v947, %v947
      %v956 = vmul.f32 %v948, %v948
      %v957 = vmul.f32 %v949, %v949
      %v958 = vmul.f32 %v950, %v950
      %v959 = vmul.f32 %v951, %v951
      %v960 = vadd.f32 %v952, %v954
      %v961 = vadd.f32 %v960, %v956
      %v962 = vadd.f32 %v961, %v958
      %v963 = vrot.slane %v962, 4
      %v964 = vadd.f32 %v962, %v963
      %v965 = vrot.slane %v964, 2
      %v966 = vadd.f32 %v964, %v965
      %v967 = vrot.slane %v966, 1
      %v968 = vadd.f32 %v966, %v967
      %v969 = vadd.f32 %v953, %v955
      %v970 = vadd.f32 %v969, %v957
      %v971 = vadd.f32 %v970, %v959
      %v972 = vrot.slane %v971, 4
      %v973 = vadd.f32 %v971, %v972
      %v974 = vrot.slane %v973, 2
      %v975 = vadd.f32 %v973, %v974
      %v976 = vrot.slane %v975, 1
      %v977 = vadd.f32 %v975, %v976
      %v978 = vmul.f32 %v968, %v941
      %v979 = vmul.f32 %v977, %v941
      %v980 = vadd.f32 %v978, 1e-05
      %v981 = vadd.f32 %v979, 1e-05
      %v982 = vrsqrt.pop %v980
      %v983 = vrsqrt.pop %v981
      %v984 = vmul.f32 %v944, %v982
      %v985 = vmul.f32 %v945, %v983
      %v986 = vmul.f32 %v946, %v982
      %v987 = vmul.f32 %v947, %v983
      %v988 = vmul.f32 %v948, %v982
      %v989 = vmul.f32 %v949, %v983
      %v990 = vmul.f32 %v950, %v982
      %v991 = vmul.f32 %v951, %v983
      %v992 = vld [vmem:[%s4] sm:$0xf]
      %v993 = vld [vmem:[%s4 + $0x4] sm:$0xf]
      %v994 = vld [vmem:[%s4 + $0x8] sm:$0xf]
      %v995 = vld [vmem:[%s4 + $0xc] sm:$0xf]
      %v996 = vld [vmem:[%s4 + $0x10] sm:$0xf]
      %v997 = vld [vmem:[%s4 + $0x14] sm:$0xf]
      %v998 = vld [vmem:[%s4 + $0x18] sm:$0xf]
      %v999 = vld [vmem:[%s4 + $0x1c] sm:$0xf]
      %v1000 = vpack.c.bf16 %v986, %v984
      %v1001 = vpack.c.bf16 %v987, %v985
      %v1002 = vpack.c.bf16 %v990, %v988
      %v1003 = vpack.c.bf16 %v991, %v989
      %v1004 = vld [vmem:[%s5] sm:$0xff]
      %v1005 = vld [vmem:[%s5 + $0x8] sm:$0xff]
      %v1006 = vld [vmem:[%s5 + $0x10] sm:$0xff]
      %v1007 = vld [vmem:[%s5 + $0x18] sm:$0xff]
      %v1008 = vld [vmem:[%s5 + $0x20] sm:$0xff]
      %v1009 = vld [vmem:[%s5 + $0x28] sm:$0xff]
      %v1010 = vld [vmem:[%s5 + $0x30] sm:$0xff]
      %v1011 = vld [vmem:[%s5 + $0x38] sm:$0xff]
      %1013 = vset.pattern.permute.xlu0 0
      %1014 = vperm.xlu0 %1013, %v1004
      %v1015 = vpop.permute.xlu0 %1014
      %1018 = vset.pattern.permute.xlu0 0
      %1019 = vperm.xlu0 %1018, %v1005
      %v1020 = vpop.permute.xlu0 %1019
      %1023 = vset.pattern.permute.xlu0 0
      %1024 = vperm.xlu0 %1023, %v1006
      %v1025 = vpop.permute.xlu0 %1024
      %1028 = vset.pattern.permute.xlu0 0
      %1029 = vperm.xlu0 %1028, %v1007
      %v1030 = vpop.permute.xlu0 %1029
      %1033 = vset.pattern.permute.xlu0 0
      %1034 = vperm.xlu0 %1033, %v1008
      %v1035 = vpop.permute.xlu0 %1034
      %1038 = vset.pattern.permute.xlu0 0
      %1039 = vperm.xlu0 %1038, %v1009
      %v1040 = vpop.permute.xlu0 %1039
      %1043 = vset.pattern.permute.xlu0 0
      %1044 = vperm.xlu0 %1043, %v1010
      %v1045 = vpop.permute.xlu0 %1044
      %1048 = vset.pattern.permute.xlu0 0
      %1049 = vperm.xlu0 %1048, %v1011
      %v1050 = vpop.permute.xlu0 %1049
      %v1060 = vunpack.c.l.b16 %v992
      %v1061 = vunpack.c.l.b16 %v993
      %v1062 = vunpack.c.l.b16 %v994
      %v1063 = vunpack.c.l.b16 %v995
      %v1064 = vunpack.c.l.b16 %v996
      %v1065 = vunpack.c.l.b16 %v997
      %v1066 = vunpack.c.l.b16 %v998
      %v1067 = vunpack.c.l.b16 %v999
      %v1068 = vpack.c.b16 %v1061, %v1060
      %v1069 = vpack.c.b16 %v1063, %v1062
      %v1070 = vpack.c.b16 %v1065, %v1064
      %v1071 = vpack.c.b16 %v1067, %v1066
      %vm1072 = vcmask 261120
      %v1074 = vsel %vm1072, %v1068, 0
      %v1077 = vsel %vm1072, %v1069, 0
      %v1080 = vsel %vm1072, %v1070, 0
      %v1083 = vsel %vm1072, %v1071, 0
      %1085 = vmatprep.subr.bf16.mxu0 0
      %1086 = vmatpush1.bf16.msra.mxu0 0
      %1087 = vmatprep.subr.bf16.mxu0 0
      %1088 = vmatpush1.bf16.msra.mxu0 0
      %1089 = vmatprep.subr.bf16.mxu0 0
      %1090 = vmatpush1.bf16.msra.mxu0 0
      %1091 = vmatprep.subr.bf16.mxu0 0
      %1092 = vmatpush1.bf16.msra.mxu0 0
      %1093 = vmatprep.subr.bf16.mxu0 0
      %1094 = vmatpush1.bf16.msra.mxu0 0
      %1095 = vmatprep.subr.bf16.mxu0 0
      %1096 = vmatpush1.bf16.msra.mxu0 0
      %1097 = vmatprep.subr.bf16.mxu0 %v1003
      %1098 = vmatpush1.bf16.msra.mxu0 %v1002
      %1099 = vmatprep.subr.bf16.mxu0 %v1001
      %1100 = vmatpush1.bf16.msra.mxu0 %v1000
      %1101 = vmatprep.subr.bf16.mxu0 0
      %1102 = vmatpush2.bf16.msra.mxu0 0
      %1103 = vmatprep.subr.bf16.mxu0 0
      %1104 = vmatpush2.bf16.msra.mxu0 0
      %1105 = vmatprep.subr.bf16.mxu0 0
      %1106 = vmatpush2.bf16.msra.mxu0 0
      %1107 = vmatprep.subr.bf16.mxu0 0
      %1108 = vmatpush2.bf16.msra.mxu0 0
      %1109 = vmatprep.subr.bf16.mxu0 0
      %1110 = vmatpush2.bf16.msra.mxu0 0
      %1111 = vmatprep.subr.bf16.mxu0 0
      %1112 = vmatpush2.bf16.msra.mxu0 0
      %1113 = vmatprep.subr.bf16.mxu0 0
      %1114 = vmatpush2.bf16.msra.mxu0 0
      %1115 = vmatprep.subr.bf16.mxu0 0
      %1116 = vmatpush2.bf16.msra.mxu0 0
      %1117 = vmatprep.mubr.bf16.mxu0 0
      %1118 = vmatmul.mubr.bf16.gmra.mxu0 %v1074
      %v1119 = vpop.f32.mrf.mxu0
      %v1120 = vadd.f32 %v1015, %v1119
      %v1121 = vpop.f32.mrf.mxu0
      %v1122 = vadd.f32 %v1015, %v1121
      %v1123 = vpop.f32.mrf.mxu0
      %v1124 = vadd.f32 %v1020, %v1123
      %v1125 = vpop.f32.mrf.mxu0
      %v1126 = vadd.f32 %v1020, %v1125
      %1127 = vmatprep.mubr.bf16.mxu0 0
      %1128 = vmatmul.mubr.bf16.gmra.mxu0 %v1077
      %v1129 = vpop.f32.mrf.mxu0
      %v1130 = vadd.f32 %v1025, %v1129
      %v1131 = vpop.f32.mrf.mxu0
      %v1132 = vadd.f32 %v1025, %v1131
      %v1133 = vpop.f32.mrf.mxu0
      %v1134 = vadd.f32 %v1030, %v1133
      %v1135 = vpop.f32.mrf.mxu0
      %v1136 = vadd.f32 %v1030, %v1135
      %1137 = vmatprep.mubr.bf16.mxu0 0
      %1138 = vmatmul.mubr.bf16.gmra.mxu0 %v1080
      %v1139 = vpop.f32.mrf.mxu0
      %v1140 = vadd.f32 %v1035, %v1139
      %v1141 = vpop.f32.mrf.mxu0
      %v1142 = vadd.f32 %v1035, %v1141
      %v1143 = vpop.f32.mrf.mxu0
      %v1144 = vadd.f32 %v1040, %v1143
      %v1145 = vpop.f32.mrf.mxu0
      %v1146 = vadd.f32 %v1040, %v1145
      %1147 = vmatprep.mubr.bf16.mxu0 0
      %1148 = vmatmul.mubr.bf16.gmra.mxu0 %v1083
      %v1149 = vpop.f32.mrf.mxu0
      %v1150 = vadd.f32 %v1045, %v1149
      %v1151 = vpop.f32.mrf.mxu0
      %v1152 = vadd.f32 %v1045, %v1151
      %v1153 = vpop.f32.mrf.mxu0
      %v1154 = vadd.f32 %v1050, %v1153
      %v1155 = vpop.f32.mrf.mxu0
      %v1156 = vadd.f32 %v1050, %v1155
      %1157 = vdwg.mxu0
      %v1158 = vmul.f32 %v1120, 0.70710677
      %v1159 = vmul.f32 %v1122, 0.70710677
      %v1160 = vmul.f32 %v1124, 0.70710677
      %v1161 = vmul.f32 %v1126, 0.70710677
      %v1162 = vmul.f32 %v1130, 0.70710677
      %v1163 = vmul.f32 %v1132, 0.70710677
      %v1164 = vmul.f32 %v1134, 0.70710677
      %v1165 = vmul.f32 %v1136, 0.70710677
      %v1166 = vmul.f32 %v1140, 0.70710677
      %v1167 = vmul.f32 %v1142, 0.70710677
      %v1168 = vmul.f32 %v1144, 0.70710677
      %v1169 = vmul.f32 %v1146, 0.70710677
      %v1170 = vmul.f32 %v1150, 0.70710677
      %v1171 = vmul.f32 %v1152, 0.70710677
      %v1172 = vmul.f32 %v1154, 0.70710677
      %v1173 = vmul.f32 %v1156, 0.70710677
      %v1174 = vand.u32 2147483647, %v1158
      %v1175 = vand.u32 2147483647, %v1159
      %v1176 = vand.u32 2147483647, %v1160
      %v1177 = vand.u32 2147483647, %v1161
      %v1178 = vand.u32 2147483647, %v1162
      %v1179 = vand.u32 2147483647, %v1163
      %v1180 = vand.u32 2147483647, %v1164
      %v1181 = vand.u32 2147483647, %v1165
      %v1182 = vand.u32 2147483647, %v1166
      %v1183 = vand.u32 2147483647, %v1167
      %v1184 = vand.u32 2147483647, %v1168
      %v1185 = vand.u32 2147483647, %v1169
      %v1186 = vand.u32 2147483647, %v1170
      %v1187 = vand.u32 2147483647, %v1171
      %v1188 = vand.u32 2147483647, %v1172
      %v1189 = vand.u32 2147483647, %v1173
      %v1190 = vmul.f32 %v1174, 0.3275911
      %v1191 = vmul.f32 %v1175, 0.3275911
      %v1192 = vmul.f32 %v1176, 0.3275911
      %v1193 = vmul.f32 %v1177, 0.3275911
      %v1194 = vmul.f32 %v1178, 0.3275911
      %v1195 = vmul.f32 %v1179, 0.3275911
      %v1196 = vmul.f32 %v1180, 0.3275911
      %v1197 = vmul.f32 %v1181, 0.3275911
      %v1198 = vmul.f32 %v1182, 0.3275911
      %v1199 = vmul.f32 %v1183, 0.3275911
      %v1200 = vmul.f32 %v1184, 0.3275911
      %v1201 = vmul.f32 %v1185, 0.3275911
      %v1202 = vmul.f32 %v1186, 0.3275911
      %v1203 = vmul.f32 %v1187, 0.3275911
      %v1204 = vmul.f32 %v1188, 0.3275911
      %v1205 = vmul.f32 %v1189, 0.3275911
      %v1206 = vadd.f32 %v1190, 1.0
      %v1207 = vadd.f32 %v1191, 1.0
      %v1208 = vadd.f32 %v1192, 1.0
      %v1209 = vadd.f32 %v1193, 1.0
      %v1210 = vadd.f32 %v1194, 1.0
      %v1211 = vadd.f32 %v1195, 1.0
      %v1212 = vadd.f32 %v1196, 1.0
      %v1213 = vadd.f32 %v1197, 1.0
      %v1214 = vadd.f32 %v1198, 1.0
      %v1215 = vadd.f32 %v1199, 1.0
      %v1216 = vadd.f32 %v1200, 1.0
      %v1217 = vadd.f32 %v1201, 1.0
      %v1218 = vadd.f32 %v1202, 1.0
      %v1219 = vadd.f32 %v1203, 1.0
      %v1220 = vadd.f32 %v1204, 1.0
      %v1221 = vadd.f32 %v1205, 1.0
      %v1222 = vrcp.pop %v1206
      %v1223 = vrcp.pop %v1207
      %v1224 = vrcp.pop %v1208
      %v1225 = vrcp.pop %v1209
      %v1226 = vrcp.pop %v1210
      %v1227 = vrcp.pop %v1211
      %v1228 = vrcp.pop %v1212
      %v1229 = vrcp.pop %v1213
      %v1230 = vrcp.pop %v1214
      %v1231 = vrcp.pop %v1215
      %v1232 = vrcp.pop %v1216
      %v1233 = vrcp.pop %v1217
      %v1234 = vrcp.pop %v1218
      %v1235 = vrcp.pop %v1219
      %v1236 = vrcp.pop %v1220
      %v1237 = vrcp.pop %v1221
      %v1238 = vmul.f32 %v1222, 1.0614054
      %v1239 = vmul.f32 %v1223, 1.0614054
      %v1240 = vmul.f32 %v1224, 1.0614054
      %v1241 = vmul.f32 %v1225, 1.0614054
      %v1242 = vmul.f32 %v1226, 1.0614054
      %v1243 = vmul.f32 %v1227, 1.0614054
      %v1244 = vmul.f32 %v1228, 1.0614054
      %v1245 = vmul.f32 %v1229, 1.0614054
      %v1246 = vmul.f32 %v1230, 1.0614054
      %v1247 = vmul.f32 %v1231, 1.0614054
      %v1248 = vmul.f32 %v1232, 1.0614054
      %v1249 = vmul.f32 %v1233, 1.0614054
      %v1250 = vmul.f32 %v1234, 1.0614054
      %v1251 = vmul.f32 %v1235, 1.0614054
      %v1252 = vmul.f32 %v1236, 1.0614054
      %v1253 = vmul.f32 %v1237, 1.0614054
      %v1254 = vsub.f32 %v1238, 1.4531521
      %v1255 = vsub.f32 %v1239, 1.4531521
      %v1256 = vsub.f32 %v1240, 1.4531521
      %v1257 = vsub.f32 %v1241, 1.4531521
      %v1258 = vsub.f32 %v1242, 1.4531521
      %v1259 = vsub.f32 %v1243, 1.4531521
      %v1260 = vsub.f32 %v1244, 1.4531521
      %v1261 = vsub.f32 %v1245, 1.4531521
      %v1262 = vsub.f32 %v1246, 1.4531521
      %v1263 = vsub.f32 %v1247, 1.4531521
      %v1264 = vsub.f32 %v1248, 1.4531521
      %v1265 = vsub.f32 %v1249, 1.4531521
      %v1266 = vsub.f32 %v1250, 1.4531521
      %v1267 = vsub.f32 %v1251, 1.4531521
      %v1268 = vsub.f32 %v1252, 1.4531521
      %v1269 = vsub.f32 %v1253, 1.4531521
      %v1270 = vmul.f32 %v1254, %v1222
      %v1271 = vmul.f32 %v1255, %v1223
      %v1272 = vmul.f32 %v1256, %v1224
      %v1273 = vmul.f32 %v1257, %v1225
      %v1274 = vmul.f32 %v1258, %v1226
      %v1275 = vmul.f32 %v1259, %v1227
      %v1276 = vmul.f32 %v1260, %v1228
      %v1277 = vmul.f32 %v1261, %v1229
      %v1278 = vmul.f32 %v1262, %v1230
      %v1279 = vmul.f32 %v1263, %v1231
      %v1280 = vmul.f32 %v1264, %v1232
      %v1281 = vmul.f32 %v1265, %v1233
      %v1282 = vmul.f32 %v1266, %v1234
      %v1283 = vmul.f32 %v1267, %v1235
      %v1284 = vmul.f32 %v1268, %v1236
      %v1285 = vmul.f32 %v1269, %v1237
      %v1286 = vadd.f32 %v1270, 1.4214138
      %v1287 = vadd.f32 %v1271, 1.4214138
      %v1288 = vadd.f32 %v1272, 1.4214138
      %v1289 = vadd.f32 %v1273, 1.4214138
      %v1290 = vadd.f32 %v1274, 1.4214138
      %v1291 = vadd.f32 %v1275, 1.4214138
      %v1292 = vadd.f32 %v1276, 1.4214138
      %v1293 = vadd.f32 %v1277, 1.4214138
      %v1294 = vadd.f32 %v1278, 1.4214138
      %v1295 = vadd.f32 %v1279, 1.4214138
      %v1296 = vadd.f32 %v1280, 1.4214138
      %v1297 = vadd.f32 %v1281, 1.4214138
      %v1298 = vadd.f32 %v1282, 1.4214138
      %v1299 = vadd.f32 %v1283, 1.4214138
      %v1300 = vadd.f32 %v1284, 1.4214138
      %v1301 = vadd.f32 %v1285, 1.4214138
      %v1302 = vmul.f32 %v1286, %v1222
      %v1303 = vmul.f32 %v1287, %v1223
      %v1304 = vmul.f32 %v1288, %v1224
      %v1305 = vmul.f32 %v1289, %v1225
      %v1306 = vmul.f32 %v1290, %v1226
      %v1307 = vmul.f32 %v1291, %v1227
      %v1308 = vmul.f32 %v1292, %v1228
      %v1309 = vmul.f32 %v1293, %v1229
      %v1310 = vmul.f32 %v1294, %v1230
      %v1311 = vmul.f32 %v1295, %v1231
      %v1312 = vmul.f32 %v1296, %v1232
      %v1313 = vmul.f32 %v1297, %v1233
      %v1314 = vmul.f32 %v1298, %v1234
      %v1315 = vmul.f32 %v1299, %v1235
      %v1316 = vmul.f32 %v1300, %v1236
      %v1317 = vmul.f32 %v1301, %v1237
      %v1318 = vsub.f32 %v1302, 0.28449672
      %v1319 = vsub.f32 %v1303, 0.28449672
      %v1320 = vsub.f32 %v1304, 0.28449672
      %v1321 = vsub.f32 %v1305, 0.28449672
      %v1322 = vsub.f32 %v1306, 0.28449672
      %v1323 = vsub.f32 %v1307, 0.28449672
      %v1324 = vsub.f32 %v1308, 0.28449672
      %v1325 = vsub.f32 %v1309, 0.28449672
      %v1326 = vsub.f32 %v1310, 0.28449672
      %v1327 = vsub.f32 %v1311, 0.28449672
      %v1328 = vsub.f32 %v1312, 0.28449672
      %v1329 = vsub.f32 %v1313, 0.28449672
      %v1330 = vsub.f32 %v1314, 0.28449672
      %v1331 = vsub.f32 %v1315, 0.28449672
      %v1332 = vsub.f32 %v1316, 0.28449672
      %v1333 = vsub.f32 %v1317, 0.28449672
      %v1334 = vmul.f32 %v1318, %v1222
      %v1335 = vmul.f32 %v1319, %v1223
      %v1336 = vmul.f32 %v1320, %v1224
      %v1337 = vmul.f32 %v1321, %v1225
      %v1338 = vmul.f32 %v1322, %v1226
      %v1339 = vmul.f32 %v1323, %v1227
      %v1340 = vmul.f32 %v1324, %v1228
      %v1341 = vmul.f32 %v1325, %v1229
      %v1342 = vmul.f32 %v1326, %v1230
      %v1343 = vmul.f32 %v1327, %v1231
      %v1344 = vmul.f32 %v1328, %v1232
      %v1345 = vmul.f32 %v1329, %v1233
      %v1346 = vmul.f32 %v1330, %v1234
      %v1347 = vmul.f32 %v1331, %v1235
      %v1348 = vmul.f32 %v1332, %v1236
      %v1349 = vmul.f32 %v1333, %v1237
      %v1350 = vadd.f32 %v1334, 0.2548296
      %v1351 = vadd.f32 %v1335, 0.2548296
      %v1352 = vadd.f32 %v1336, 0.2548296
      %v1353 = vadd.f32 %v1337, 0.2548296
      %v1354 = vadd.f32 %v1338, 0.2548296
      %v1355 = vadd.f32 %v1339, 0.2548296
      %v1356 = vadd.f32 %v1340, 0.2548296
      %v1357 = vadd.f32 %v1341, 0.2548296
      %v1358 = vadd.f32 %v1342, 0.2548296
      %v1359 = vadd.f32 %v1343, 0.2548296
      %v1360 = vadd.f32 %v1344, 0.2548296
      %v1361 = vadd.f32 %v1345, 0.2548296
      %v1362 = vadd.f32 %v1346, 0.2548296
      %v1363 = vadd.f32 %v1347, 0.2548296
      %v1364 = vadd.f32 %v1348, 0.2548296
      %v1365 = vadd.f32 %v1349, 0.2548296
      %v1366 = vmul.f32 %v1350, %v1222
      %v1367 = vmul.f32 %v1351, %v1223
      %v1368 = vmul.f32 %v1352, %v1224
      %v1369 = vmul.f32 %v1353, %v1225
      %v1370 = vmul.f32 %v1354, %v1226
      %v1371 = vmul.f32 %v1355, %v1227
      %v1372 = vmul.f32 %v1356, %v1228
      %v1373 = vmul.f32 %v1357, %v1229
      %v1374 = vmul.f32 %v1358, %v1230
      %v1375 = vmul.f32 %v1359, %v1231
      %v1376 = vmul.f32 %v1360, %v1232
      %v1377 = vmul.f32 %v1361, %v1233
      %v1378 = vmul.f32 %v1362, %v1234
      %v1379 = vmul.f32 %v1363, %v1235
      %v1380 = vmul.f32 %v1364, %v1236
      %v1381 = vmul.f32 %v1365, %v1237
      %v1382 = vsub.f32 0.0, %v1174
      %v1383 = vsub.f32 0.0, %v1175
      %v1384 = vsub.f32 0.0, %v1176
      %v1385 = vsub.f32 0.0, %v1177
      %v1386 = vsub.f32 0.0, %v1178
      %v1387 = vsub.f32 0.0, %v1179
      %v1388 = vsub.f32 0.0, %v1180
      %v1389 = vsub.f32 0.0, %v1181
      %v1390 = vsub.f32 0.0, %v1182
      %v1391 = vsub.f32 0.0, %v1183
      %v1392 = vsub.f32 0.0, %v1184
      %v1393 = vsub.f32 0.0, %v1185
      %v1394 = vsub.f32 0.0, %v1186
      %v1395 = vsub.f32 0.0, %v1187
      %v1396 = vsub.f32 0.0, %v1188
      %v1397 = vsub.f32 0.0, %v1189
      %v1398 = vmul.f32 %v1382, %v1174
      %v1399 = vmul.f32 %v1383, %v1175
      %v1400 = vmul.f32 %v1384, %v1176
      %v1401 = vmul.f32 %v1385, %v1177
      %v1402 = vmul.f32 %v1386, %v1178
      %v1403 = vmul.f32 %v1387, %v1179
      %v1404 = vmul.f32 %v1388, %v1180
      %v1405 = vmul.f32 %v1389, %v1181
      %v1406 = vmul.f32 %v1390, %v1182
      %v1407 = vmul.f32 %v1391, %v1183
      %v1408 = vmul.f32 %v1392, %v1184
      %v1409 = vmul.f32 %v1393, %v1185
      %v1410 = vmul.f32 %v1394, %v1186
      %v1411 = vmul.f32 %v1395, %v1187
      %v1412 = vmul.f32 %v1396, %v1188
      %v1413 = vmul.f32 %v1397, %v1189
      %v1414 = vmul.f32 %v1398, 1.442695
      %v1415 = vpow.pop %v1414
      %v1416 = vmul.f32 %v1399, 1.442695
      %v1417 = vpow.pop %v1416
      %v1418 = vmul.f32 %v1400, 1.442695
      %v1419 = vpow.pop %v1418
      %v1420 = vmul.f32 %v1401, 1.442695
      %v1421 = vpow.pop %v1420
      %v1422 = vmul.f32 %v1402, 1.442695
      %v1423 = vpow.pop %v1422
      %v1424 = vmul.f32 %v1403, 1.442695
      %v1425 = vpow.pop %v1424
      %v1426 = vmul.f32 %v1404, 1.442695
      %v1427 = vpow.pop %v1426
      %v1428 = vmul.f32 %v1405, 1.442695
      %v1429 = vpow.pop %v1428
      %v1430 = vmul.f32 %v1406, 1.442695
      %v1431 = vpow.pop %v1430
      %v1432 = vmul.f32 %v1407, 1.442695
      %v1433 = vpow.pop %v1432
      %v1434 = vmul.f32 %v1408, 1.442695
      %v1435 = vpow.pop %v1434
      %v1436 = vmul.f32 %v1409, 1.442695
      %v1437 = vpow.pop %v1436
      %v1438 = vmul.f32 %v1410, 1.442695
      %v1439 = vpow.pop %v1438
      %v1440 = vmul.f32 %v1411, 1.442695
      %v1441 = vpow.pop %v1440
      %v1442 = vmul.f32 %v1412, 1.442695
      %v1443 = vpow.pop %v1442
      %v1444 = vmul.f32 %v1413, 1.442695
      %v1445 = vpow.pop %v1444
      %v1446 = vmul.f32 %v1366, %v1415
      %v1447 = vmul.f32 %v1367, %v1417
      %v1448 = vmul.f32 %v1368, %v1419
      %v1449 = vmul.f32 %v1369, %v1421
      %v1450 = vmul.f32 %v1370, %v1423
      %v1451 = vmul.f32 %v1371, %v1425
      %v1452 = vmul.f32 %v1372, %v1427
      %v1453 = vmul.f32 %v1373, %v1429
      %v1454 = vmul.f32 %v1374, %v1431
      %v1455 = vmul.f32 %v1375, %v1433
      %v1456 = vmul.f32 %v1376, %v1435
      %v1457 = vmul.f32 %v1377, %v1437
      %v1458 = vmul.f32 %v1378, %v1439
      %v1459 = vmul.f32 %v1379, %v1441
      %v1460 = vmul.f32 %v1380, %v1443
      %v1461 = vmul.f32 %v1381, %v1445
      %v1462 = vsub.f32 1.0, %v1446
      %v1463 = vsub.f32 1.0, %v1447
      %v1464 = vsub.f32 1.0, %v1448
      %v1465 = vsub.f32 1.0, %v1449
      %v1466 = vsub.f32 1.0, %v1450
      %v1467 = vsub.f32 1.0, %v1451
      %v1468 = vsub.f32 1.0, %v1452
      %v1469 = vsub.f32 1.0, %v1453
      %v1470 = vsub.f32 1.0, %v1454
      %v1471 = vsub.f32 1.0, %v1455
      %v1472 = vsub.f32 1.0, %v1456
      %v1473 = vsub.f32 1.0, %v1457
      %v1474 = vsub.f32 1.0, %v1458
      %v1475 = vsub.f32 1.0, %v1459
      %v1476 = vsub.f32 1.0, %v1460
      %v1477 = vsub.f32 1.0, %v1461
      %vm1478 = vcmp.ge.f32.partialorder %v1158, 0.0
      %vm1479 = vcmp.ge.f32.partialorder %v1159, 0.0
      %vm1480 = vcmp.ge.f32.partialorder %v1160, 0.0
      %vm1481 = vcmp.ge.f32.partialorder %v1161, 0.0
      %vm1482 = vcmp.ge.f32.partialorder %v1162, 0.0
      %vm1483 = vcmp.ge.f32.partialorder %v1163, 0.0
      %vm1484 = vcmp.ge.f32.partialorder %v1164, 0.0
      %vm1485 = vcmp.ge.f32.partialorder %v1165, 0.0
      %vm1486 = vcmp.ge.f32.partialorder %v1166, 0.0
      %vm1487 = vcmp.ge.f32.partialorder %v1167, 0.0
      %vm1488 = vcmp.ge.f32.partialorder %v1168, 0.0
      %vm1489 = vcmp.ge.f32.partialorder %v1169, 0.0
      %vm1490 = vcmp.ge.f32.partialorder %v1170, 0.0
      %vm1491 = vcmp.ge.f32.partialorder %v1171, 0.0
      %vm1492 = vcmp.ge.f32.partialorder %v1172, 0.0
      %vm1493 = vcmp.ge.f32.partialorder %v1173, 0.0
      %v1494 = vsub.f32 0.0, %v1462
      %v1495 = vsub.f32 0.0, %v1463
      %v1496 = vsub.f32 0.0, %v1464
      %v1497 = vsub.f32 0.0, %v1465
      %v1498 = vsub.f32 0.0, %v1466
      %v1499 = vsub.f32 0.0, %v1467
      %v1500 = vsub.f32 0.0, %v1468
      %v1501 = vsub.f32 0.0, %v1469
      %v1502 = vsub.f32 0.0, %v1470
      %v1503 = vsub.f32 0.0, %v1471
      %v1504 = vsub.f32 0.0, %v1472
      %v1505 = vsub.f32 0.0, %v1473
      %v1506 = vsub.f32 0.0, %v1474
      %v1507 = vsub.f32 0.0, %v1475
      %v1508 = vsub.f32 0.0, %v1476
      %v1509 = vsub.f32 0.0, %v1477
      %v1510 = vsel %vm1478, %v1462, %v1494
      %v1511 = vsel %vm1479, %v1463, %v1495
      %v1512 = vsel %vm1480, %v1464, %v1496
      %v1513 = vsel %vm1481, %v1465, %v1497
      %v1514 = vsel %vm1482, %v1466, %v1498
      %v1515 = vsel %vm1483, %v1467, %v1499
      %v1516 = vsel %vm1484, %v1468, %v1500
      %v1517 = vsel %vm1485, %v1469, %v1501
      %v1518 = vsel %vm1486, %v1470, %v1502
      %v1519 = vsel %vm1487, %v1471, %v1503
      %v1520 = vsel %vm1488, %v1472, %v1504
      %v1521 = vsel %vm1489, %v1473, %v1505
      %v1522 = vsel %vm1490, %v1474, %v1506
      %v1523 = vsel %vm1491, %v1475, %v1507
      %v1524 = vsel %vm1492, %v1476, %v1508
      %v1525 = vsel %vm1493, %v1477, %v1509
      %v1526 = vmul.f32 %v1120, 0.5
      %v1527 = vmul.f32 %v1122, 0.5
      %v1528 = vmul.f32 %v1124, 0.5
      %v1529 = vmul.f32 %v1126, 0.5
      %v1530 = vmul.f32 %v1130, 0.5
      %v1531 = vmul.f32 %v1132, 0.5
      %v1532 = vmul.f32 %v1134, 0.5
      %v1533 = vmul.f32 %v1136, 0.5
      %v1534 = vmul.f32 %v1140, 0.5
      %v1535 = vmul.f32 %v1142, 0.5
      %v1536 = vmul.f32 %v1144, 0.5
      %v1537 = vmul.f32 %v1146, 0.5
      %v1538 = vmul.f32 %v1150, 0.5
      %v1539 = vmul.f32 %v1152, 0.5
      %v1540 = vmul.f32 %v1154, 0.5
      %v1541 = vmul.f32 %v1156, 0.5
      %v1542 = vadd.f32 %v1510, 1.0
      %v1543 = vadd.f32 %v1511, 1.0
      %v1544 = vadd.f32 %v1512, 1.0
      %v1545 = vadd.f32 %v1513, 1.0
      %v1546 = vadd.f32 %v1514, 1.0
      %v1547 = vadd.f32 %v1515, 1.0
      %v1548 = vadd.f32 %v1516, 1.0
      %v1549 = vadd.f32 %v1517, 1.0
      %v1550 = vadd.f32 %v1518, 1.0
      %v1551 = vadd.f32 %v1519, 1.0
      %v1552 = vadd.f32 %v1520, 1.0
      %v1553 = vadd.f32 %v1521, 1.0
      %v1554 = vadd.f32 %v1522, 1.0
      %v1555 = vadd.f32 %v1523, 1.0
      %v1556 = vadd.f32 %v1524, 1.0
      %v1557 = vadd.f32 %v1525, 1.0
      %v1558 = vmul.f32 %v1526, %v1542
      %v1559 = vmul.f32 %v1527, %v1543
      %v1560 = vmul.f32 %v1528, %v1544
      %v1561 = vmul.f32 %v1529, %v1545
      %v1562 = vmul.f32 %v1530, %v1546
      %v1563 = vmul.f32 %v1531, %v1547
      %v1564 = vmul.f32 %v1532, %v1548
      %v1565 = vmul.f32 %v1533, %v1549
      %v1566 = vmul.f32 %v1534, %v1550
      %v1567 = vmul.f32 %v1535, %v1551
      %v1568 = vmul.f32 %v1536, %v1552
      %v1569 = vmul.f32 %v1537, %v1553
      %v1570 = vmul.f32 %v1538, %v1554
      %v1571 = vmul.f32 %v1539, %v1555
      %v1572 = vmul.f32 %v1540, %v1556
      %v1573 = vmul.f32 %v1541, %v1557
      %v1574 = vld [vmem:[%s6] sm:$0xf]
      %v1575 = vld [vmem:[%s6 + $0x4] sm:$0xf]
      %v1576 = vld [vmem:[%s6 + $0x8] sm:$0xf]
      %v1577 = vld [vmem:[%s6 + $0xc] sm:$0xf]
      %v1578 = vpack.c.bf16 %v1560, %v1558
      %v1579 = vpack.c.bf16 %v1561, %v1559
      %v1580 = vpack.c.bf16 %v1564, %v1562
      %v1581 = vpack.c.bf16 %v1565, %v1563
      %v1582 = vpack.c.bf16 %v1568, %v1566
      %v1583 = vpack.c.bf16 %v1569, %v1567
      %v1584 = vpack.c.bf16 %v1572, %v1570
      %v1585 = vpack.c.bf16 %v1573, %v1571
      %v1586 = vld [vmem:[%s7] sm:$0xff]
      %v1587 = vld [vmem:[%s7 + $0x8] sm:$0xff]
      %v1588 = vld [vmem:[%s7 + $0x10] sm:$0xff]
      %v1589 = vld [vmem:[%s7 + $0x18] sm:$0xff]
      %1591 = vset.pattern.permute.xlu0 0
      %1592 = vperm.xlu0 %1591, %v1586
      %v1593 = vpop.permute.xlu0 %1592
      %1596 = vset.pattern.permute.xlu0 0
      %1597 = vperm.xlu0 %1596, %v1587
      %v1598 = vpop.permute.xlu0 %1597
      %1601 = vset.pattern.permute.xlu0 0
      %1602 = vperm.xlu0 %1601, %v1588
      %v1603 = vpop.permute.xlu0 %1602
      %1606 = vset.pattern.permute.xlu0 0
      %1607 = vperm.xlu0 %1606, %v1589
      %v1608 = vpop.permute.xlu0 %1607
      %v1614 = vunpack.c.l.b16 %v1574
      %v1615 = vunpack.c.l.b16 %v1575
      %v1616 = vunpack.c.l.b16 %v1576
      %v1617 = vunpack.c.l.b16 %v1577
      %v1618 = vpack.c.b16 %v1615, %v1614
      %v1619 = vpack.c.b16 %v1617, %v1616
      %vm1620 = vcmask 523264
      %v1622 = vsel %vm1620, %v1618, 0
      %v1625 = vsel %vm1620, %v1619, 0
      %1627 = vmatprep.subr.bf16.mxu0 0
      %1628 = vmatpush1.bf16.msra.mxu0 0
      %1629 = vmatprep.subr.bf16.mxu0 0
      %1630 = vmatpush1.bf16.msra.mxu0 0
      %1631 = vmatprep.subr.bf16.mxu0 0
      %1632 = vmatpush1.bf16.msra.mxu0 0
      %1633 = vmatprep.subr.bf16.mxu0 0
      %1634 = vmatpush1.bf16.msra.mxu0 0
      %1635 = vmatprep.subr.bf16.mxu0 %v1585
      %1636 = vmatpush1.bf16.msra.mxu0 %v1584
      %1637 = vmatprep.subr.bf16.mxu0 %v1583
      %1638 = vmatpush1.bf16.msra.mxu0 %v1582
      %1639 = vmatprep.subr.bf16.mxu0 %v1581
      %1640 = vmatpush1.bf16.msra.mxu0 %v1580
      %1641 = vmatprep.subr.bf16.mxu0 %v1579
      %1642 = vmatpush1.bf16.msra.mxu0 %v1578
      %1643 = vmatprep.subr.bf16.mxu0 0
      %1644 = vmatpush2.bf16.msra.mxu0 0
      %1645 = vmatprep.subr.bf16.mxu0 0
      %1646 = vmatpush2.bf16.msra.mxu0 0
      %1647 = vmatprep.subr.bf16.mxu0 0
      %1648 = vmatpush2.bf16.msra.mxu0 0
      %1649 = vmatprep.subr.bf16.mxu0 0
      %1650 = vmatpush2.bf16.msra.mxu0 0
      %1651 = vmatprep.subr.bf16.mxu0 0
      %1652 = vmatpush2.bf16.msra.mxu0 0
      %1653 = vmatprep.subr.bf16.mxu0 0
      %1654 = vmatpush2.bf16.msra.mxu0 0
      %1655 = vmatprep.subr.bf16.mxu0 0
      %1656 = vmatpush2.bf16.msra.mxu0 0
      %1657 = vmatprep.subr.bf16.mxu0 0
      %1658 = vmatpush2.bf16.msra.mxu0 0
      %1659 = vmatprep.mubr.bf16.mxu0 0
      %1660 = vmatmul.mubr.bf16.gmra.mxu0 %v1622
      %v1661 = vpop.f32.mrf.mxu0
      %v1662 = vadd.f32 %v1593, %v1661
      %v1663 = vpop.f32.mrf.mxu0
      %v1664 = vadd.f32 %v1593, %v1663
      %v1665 = vpop.f32.mrf.mxu0
      %v1666 = vadd.f32 %v1598, %v1665
      %v1667 = vpop.f32.mrf.mxu0
      %v1668 = vadd.f32 %v1598, %v1667
      %1669 = vmatprep.mubr.bf16.mxu0 0
      %1670 = vmatmul.mubr.bf16.gmra.mxu0 %v1625
      %v1671 = vpop.f32.mrf.mxu0
      %v1672 = vadd.f32 %v1603, %v1671
      %v1673 = vpop.f32.mrf.mxu0
      %v1674 = vadd.f32 %v1603, %v1673
      %v1675 = vpop.f32.mrf.mxu0
      %v1676 = vadd.f32 %v1608, %v1675
      %v1677 = vpop.f32.mrf.mxu0
      %v1678 = vadd.f32 %v1608, %v1677
      %1679 = vdwg.mxu0
      %v1680 = vadd.f32 %v1662, %v307
      %v1681 = vadd.f32 %v1664, %v308
      %v1682 = vadd.f32 %v1666, %v309
      %v1683 = vadd.f32 %v1668, %v310
      %v1684 = vadd.f32 %v1672, %v311
      %v1685 = vadd.f32 %v1674, %v312
      %v1686 = vadd.f32 %v1676, %v313
      %v1687 = vadd.f32 %v1678, %v314
      %1688 = vst [vmem:[%s305] sm:$0xff] %v1680
      %1689 = vst [vmem:[%s305 + $0x8] sm:$0xff] %v1681
      %1690 = vst [vmem:[%s305 + $0x10] sm:$0xff] %v1682
      %1691 = vst [vmem:[%s305 + $0x18] sm:$0xff] %v1683
      %1692 = vst [vmem:[%s305 + $0x20] sm:$0xff] %v1684
      %1693 = vst [vmem:[%s305 + $0x28] sm:$0xff] %v1685
      %1694 = vst [vmem:[%s305 + $0x30] sm:$0xff] %v1686
      %1695 = vst [vmem:[%s305 + $0x38] sm:$0xff] %v1687
      %p1696 = scmp.lt.s32.totalorder %s19, 1
      %s1697 = scalar_select %p1696, %s19, 1
      %s1698 = smul.addr %s1697, 8
      %s1699 = smul.addr %s1698, 8
      %s1700 = scalar_lea.vmem %s8, %s1699
      // Predicated region
      $region53: #{metanext_block.1} parent=51 // pred_check
        %p1701 = pneg %p210
      $region54: #{metanext_block.1} parent=51 // pred_check_branch
        %1703 = sbr.rel (%p1701) target = $region56
      $region55: #{metanext_block.1} parent=51 // pred_region
        _
      $region56: #{metanext_block.1} parent=51 // pred_fallthru
        _
    $region52: #{metanext_block.1} parent=5 // pred_fallthru
      _
    %p1704 = scmp.le.s32.totalorder 2, %s14
    // Predicated region
    $region57: #{metanext_block.1} parent=5 // pred_check
      %p1705 = pneg %p1704
    $region58: #{metanext_block.1} parent=5 // pred_check_branch
      %1707 = sbr.rel (%p1705) target = $region60
    $region59: #{metanext_block.1} parent=5 // pred_region
      %s1708 = ssub.s32 %s14, 2
      // Predicated region
      $region61: #{metanext_block.1} parent=59 // pred_check
        %p1709 = pneg %p216
      $region62: #{metanext_block.1} parent=59 // pred_check_branch
        %1711 = sbr.rel (%p1709) target = $region64
      $region63: #{metanext_block.1} parent=59 // pred_region
        %p1712 = scmp.lt.s32.totalorder %s20, 1
        %s1713 = scalar_select %p1712, %s20, 1
        %s1714 = smul.addr %s1713, 8
        %s1715 = smul.addr %s1714, 8
        %s1716 = scalar_lea.vmem %s8, %s1715
      $region64: #{metanext_block.1} parent=59 // pred_fallthru
        _
    $region60: #{metanext_block.1} parent=5 // pred_fallthru
      _
  $region6: #{metanext_block.1} parent=0 // loop_footer
    %s18 = sadd.s32 1, %s14
  $region7: #{metanext_block.1} parent=0 // loop_footer_branch
    %13 = sbr.rel target = $region3
  $region8: #{metanext_block.1} parent=0 // loop_exit
    _

</llo_original>
